<compile_context>
chip_gen: v5e
topology: v5e:2x2
jax: 0.10.0
libtpu: 0.0.40
codegen_flags: <defaults>
</compile_context>

<pallas_src>
import jax
import jax.numpy as jnp
from jax.experimental import pallas as pl
from jax.experimental.pallas import tpu as pltpu

_LANES = 128
_SUBLANES = 8
_MAX_TM = 512


def _round_up(v, m):
    return (v + m - 1) // m * m


def _mlp_kernel(x_ref, w1_ref, b1_ref, w2_ref, b2_ref, w3_ref, b3_ref, o_ref):
    # fc1 + ReLU (dropout is identity in eval mode).  bf16 operands to the
    # MXU, f32 accumulation via preferred_element_type.
    x = x_ref[...].astype(jnp.bfloat16)  # no-op if caller already feeds bf16
    h1 = jnp.dot(x, w1_ref[...], preferred_element_type=jnp.float32)
    h1 = jnp.maximum(h1 + b1_ref[...], 0.0)
    # fc2 + ReLU
    h2 = jnp.dot(h1.astype(jnp.bfloat16), w2_ref[...],
                 preferred_element_type=jnp.float32)
    h2 = jnp.maximum(h2 + b2_ref[...], 0.0)
    # fc3 (no activation); output lanes padded to 128 -> dense vst.
    out = jnp.dot(h2.astype(jnp.bfloat16), w3_ref[...],
                  preferred_element_type=jnp.float32)
    o_ref[...] = (out + b3_ref[...]).astype(o_ref.dtype)


def prepare_params(w1, b1, w2, b2, w3, b3):
    """One-time parameter prep: bf16 weights, lane-pad fc3 to 128 columns.

    Do this ONCE and reuse the result every control step — do not re-cast /
    re-pad per call.
    """
    actions = w3.shape[1]
    n_pad = _round_up(actions, _LANES)
    w3p = jnp.zeros((w3.shape[0], n_pad), w3.dtype).at[:, :actions].set(w3)
    b3p = jnp.zeros((1, n_pad), b3.dtype).at[:, :actions].set(b3)
    prepared = (
        w1.astype(jnp.bfloat16), b1.astype(jnp.float32),
        w2.astype(jnp.bfloat16), b2.astype(jnp.float32),
        w3p.astype(jnp.bfloat16), b3p.astype(jnp.float32),
    )
    return prepared, actions


def _resident_spec(shape):
    """Constant-index (VMEM-resident) block; single-buffered when supported."""
    try:
        return pl.BlockSpec(shape, lambda i: (0, 0),
                            pipeline_mode=pl.Buffered(buffer_count=1))
    except TypeError:  # older API without pipeline_mode — fall back cleanly
        return pl.BlockSpec(shape, lambda i: (0, 0))


def control_module_forward(x, prepared, actions, *, out_dtype=jnp.float32):
    """x: [B, 768] (f32 or bf16). prepared: output of prepare_params.

    Returns [B, actions] in `out_dtype`.
    """
    w1, b1, w2, b2, w3p, b3p = prepared
    B, D = x.shape
    n_pad = w3p.shape[1]

    # Sublane-aligned batch tile, up to 512 rows.  The last tile may be
    # ragged — Pallas masks the out-of-range rows (never written), so no
    # wrapper-side padding copy is needed.
    TM = min(_MAX_TM, _round_up(B, _SUBLANES))
    num_tiles = pl.cdiv(B, TM)

    # "parallel" lets v7x shard the batch grid across its 2 TensorCores, but
    # each core then fetches its own ~1.1 MB weight copy — only worth it once
    # there are enough batch tiles to amortize the duplicated DMA.
    semantics = ("parallel",) if num_tiles >= 4 else ("arbitrary",)

    out = pl.pallas_call(
        _mlp_kernel,
        out_shape=jax.ShapeDtypeStruct((B, n_pad), out_dtype),
        grid_spec=pltpu.PrefetchScalarGridSpec(
            num_scalar_prefetch=0,
            grid=(num_tiles,),
            in_specs=[
                pl.BlockSpec((TM, D), lambda i: (i, 0)),
                # Weights / biases: same block every step -> VMEM-resident.
                _resident_spec(w1.shape), _resident_spec(b1.shape),
                _resident_spec(w2.shape), _resident_spec(b2.shape),
                _resident_spec(w3p.shape), _resident_spec(b3p.shape),
            ],
            out_specs=pl.BlockSpec((TM, n_pad), lambda i: (i, 0)),
        ),
        compiler_params=pltpu.CompilerParams(
            dimension_semantics=semantics,
            vmem_limit_bytes=16 << 20,
        ),
    )(x, w1, b1, w2, b2, w3p, b3p)
    return out[:, :actions]


def init_params(key, actions):
    """Deterministic synthetic parameters with nn.Linear-like scaling (f32)."""
    ks = jax.random.split(key, 6)

    def linear(kw, kb, fan_in, fan_out):
        bound = 1.0 / jnp.sqrt(fan_in)
        # stored as (in, out) == transpose of PyTorch's (out, in)
        w = jax.random.uniform(kw, (fan_in, fan_out), jnp.float32, -bound, bound)
        b = jax.random.uniform(kb, (1, fan_out), jnp.float32, -bound, bound)
        return w, b

    w1, b1 = linear(ks[0], ks[1], 768, 512)
    w2, b2 = linear(ks[2], ks[3], 512, 256)
    w3, b3 = linear(ks[4], ks[5], 256, actions)
    return w1, b1, w2, b2, w3, b3


def reference_forward(x, w1, b1, w2, b2, w3, b3):
    """Pure-f32 reference (matches the PyTorch module in eval mode)."""
    h1 = jnp.maximum(x @ w1 + b1, 0.0)
    h2 = jnp.maximum(h1 @ w2 + b2, 0.0)
    return h2 @ w3 + b3


if __name__ == "__main__":
    key = jax.random.PRNGKey(0)
    k_x, k_p = jax.random.split(key)

    ACTIONS = 10     # number of actions
    DROPOUT = 0.1    # unused in eval-mode forward

    params_f32 = init_params(k_p, ACTIONS)
    prepared, actions = prepare_params(*params_f32)

    # bf16 weights vs f32 reference -> loosened tolerance (accumulation is f32).
    def check(batch, kx):
        x = jax.random.normal(kx, (batch, 768), jnp.float32)
        out = jax.block_until_ready(control_module_forward(x, prepared, actions))
        ref = reference_forward(x, *params_f32)
        assert out.shape == (batch, ACTIONS), out.shape
        assert jnp.allclose(out, ref, atol=3e-2, rtol=3e-2), \
            f"mismatch vs reference at B={batch}"

    kxs = jax.random.split(k_x, 3)
    check(8, kxs[0])      # small, sublane-aligned single tile
    check(37, kxs[1])     # ragged single tile (masked rows exercised)
    check(1100, kxs[2])   # multi-tile grid with ragged last tile

    print("KERNEL_OK")
</pallas_src>

<mosaic_0001>
module attributes {stable_mosaic.version = 11 : i64} {
  func.func @_mlp_kernel(%arg0: i32, %arg1: memref<8x768xf32, #tpu.memory_space<vmem>>, %arg2: memref<768x512xbf16, #tpu.memory_space<vmem>>, %arg3: memref<1x512xf32, #tpu.memory_space<vmem>>, %arg4: memref<512x256xbf16, #tpu.memory_space<vmem>>, %arg5: memref<1x256xf32, #tpu.memory_space<vmem>>, %arg6: memref<256x128xbf16, #tpu.memory_space<vmem>>, %arg7: memref<1x128xf32, #tpu.memory_space<vmem>>, %arg8: memref<8x128xf32, #tpu.memory_space<vmem>>) attributes {dimension_semantics = [#tpu.dimension_semantics<arbitrary>], iteration_bounds = array<i64: 1>, scalar_prefetch = 0 : i64, scratch_operands = 0 : i64, tpu.core_type = #tpu.core_type<tc>, window_params = [{transform_indices = @transform_0, window_bounds = array<i64: 8, 768>}, {pipeline_mode = #tpu.pipeline_mode<synchronous>, transform_indices = @transform_1, window_bounds = array<i64: 768, 512>}, {pipeline_mode = #tpu.pipeline_mode<synchronous>, transform_indices = @transform_2, window_bounds = array<i64: 1, 512>}, {pipeline_mode = #tpu.pipeline_mode<synchronous>, transform_indices = @transform_3, window_bounds = array<i64: 512, 256>}, {pipeline_mode = #tpu.pipeline_mode<synchronous>, transform_indices = @transform_4, window_bounds = array<i64: 1, 256>}, {pipeline_mode = #tpu.pipeline_mode<synchronous>, transform_indices = @transform_5, window_bounds = array<i64: 256, 128>}, {pipeline_mode = #tpu.pipeline_mode<synchronous>, transform_indices = @transform_6, window_bounds = array<i64: 1, 128>}, {transform_indices = @transform_7, window_bounds = array<i64: 8, 128>}]} {
    %c0 = arith.constant 0 : index
    %c0_0 = arith.constant 0 : index
    %0 = vector.load %arg1[%c0, %c0_0] : memref<8x768xf32, #tpu.memory_space<vmem>>, vector<8x768xf32>
    %1 = arith.truncf %0 : vector<8x768xf32> to vector<8x768xbf16>
    %c0_1 = arith.constant 0 : index
    %c0_2 = arith.constant 0 : index
    %2 = vector.load %arg2[%c0_1, %c0_2] : memref<768x512xbf16, #tpu.memory_space<vmem>>, vector<768x512xbf16>
    %cst = arith.constant dense<0.000000e+00> : vector<8x512xf32>
    %3 = tpu.matmul %1, %2, %cst {dimension_numbers = #tpu.dot_dimension_numbers<[1], [0], [0], [1], [0, 0, 1, 1], [], []>} : vector<8x768xbf16>, vector<768x512xbf16>, vector<8x512xf32> -> vector<8x512xf32>
    %c0_3 = arith.constant 0 : index
    %c0_4 = arith.constant 0 : index
    %4 = vector.load %arg3[%c0_3, %c0_4] : memref<1x512xf32, #tpu.memory_space<vmem>>, vector<1x512xf32>
    %5 = vector.broadcast %4 : vector<1x512xf32> to vector<8x512xf32>
    %6 = arith.addf %3, %5 : vector<8x512xf32>
    %cst_5 = arith.constant 0.000000e+00 : f32
    %7 = vector.broadcast %cst_5 : f32 to vector<8x512xf32>
    %8 = arith.maximumf %6, %7 : vector<8x512xf32>
    %9 = arith.truncf %8 : vector<8x512xf32> to vector<8x512xbf16>
    %c0_6 = arith.constant 0 : index
    %c0_7 = arith.constant 0 : index
    %10 = vector.load %arg4[%c0_6, %c0_7] : memref<512x256xbf16, #tpu.memory_space<vmem>>, vector<512x256xbf16>
    %cst_8 = arith.constant dense<0.000000e+00> : vector<8x256xf32>
    %11 = tpu.matmul %9, %10, %cst_8 {dimension_numbers = #tpu.dot_dimension_numbers<[1], [0], [0], [1], [0, 0, 1, 1], [], []>} : vector<8x512xbf16>, vector<512x256xbf16>, vector<8x256xf32> -> vector<8x256xf32>
    %c0_9 = arith.constant 0 : index
    %c0_10 = arith.constant 0 : index
    %12 = vector.load %arg5[%c0_9, %c0_10] : memref<1x256xf32, #tpu.memory_space<vmem>>, vector<1x256xf32>
    %13 = vector.broadcast %12 : vector<1x256xf32> to vector<8x256xf32>
    %14 = arith.addf %11, %13 : vector<8x256xf32>
    %cst_11 = arith.constant 0.000000e+00 : f32
    %15 = vector.broadcast %cst_11 : f32 to vector<8x256xf32>
    %16 = arith.maximumf %14, %15 : vector<8x256xf32>
    %17 = arith.truncf %16 : vector<8x256xf32> to vector<8x256xbf16>
    %c0_12 = arith.constant 0 : index
    %c0_13 = arith.constant 0 : index
    %18 = vector.load %arg6[%c0_12, %c0_13] : memref<256x128xbf16, #tpu.memory_space<vmem>>, vector<256x128xbf16>
    %cst_14 = arith.constant dense<0.000000e+00> : vector<8x128xf32>
    %19 = tpu.matmul %17, %18, %cst_14 {dimension_numbers = #tpu.dot_dimension_numbers<[1], [0], [0], [1], [0, 0, 1, 1], [], []>} : vector<8x256xbf16>, vector<256x128xbf16>, vector<8x128xf32> -> vector<8x128xf32>
    %c0_15 = arith.constant 0 : index
    %c0_16 = arith.constant 0 : index
    %20 = vector.load %arg7[%c0_15, %c0_16] : memref<1x128xf32, #tpu.memory_space<vmem>>, vector<1x128xf32>
    %21 = vector.broadcast %20 : vector<1x128xf32> to vector<8x128xf32>
    %22 = arith.addf %19, %21 : vector<8x128xf32>
    %c0_17 = arith.constant 0 : index
    %c0_18 = arith.constant 0 : index
    %23 = vector.load %arg8[%c0_17, %c0_18] : memref<8x128xf32, #tpu.memory_space<vmem>>, vector<8x128xf32>
    tpu.vector_store %arg8[%c0_17, %c0_18], %22 {strides = array<i32>} : memref<8x128xf32, #tpu.memory_space<vmem>>, vector<8x128xf32>,
    return
  }
  func.func @transform_0(%arg0: i32) -> (i32, i32) {
    %c0_i32 = arith.constant 0 : i32
    %c0_i32_0 = arith.constant 0 : i32
    return %arg0, %c0_i32 : i32, i32
  }
  func.func @transform_1(%arg0: i32) -> (i32, i32) {
    %c0_i32 = arith.constant 0 : i32
    %c0_i32_0 = arith.constant 0 : i32
    %c0_i32_1 = arith.constant 0 : i32
    return %c0_i32, %c0_i32_0 : i32, i32
  }
  func.func @transform_2(%arg0: i32) -> (i32, i32) {
    %c0_i32 = arith.constant 0 : i32
    %c0_i32_0 = arith.constant 0 : i32
    %c0_i32_1 = arith.constant 0 : i32
    return %c0_i32, %c0_i32_0 : i32, i32
  }
  func.func @transform_3(%arg0: i32) -> (i32, i32) {
    %c0_i32 = arith.constant 0 : i32
    %c0_i32_0 = arith.constant 0 : i32
    %c0_i32_1 = arith.constant 0 : i32
    return %c0_i32, %c0_i32_0 : i32, i32
  }
  func.func @transform_4(%arg0: i32) -> (i32, i32) {
    %c0_i32 = arith.constant 0 : i32
    %c0_i32_0 = arith.constant 0 : i32
    %c0_i32_1 = arith.constant 0 : i32
    return %c0_i32, %c0_i32_0 : i32, i32
  }
  func.func @transform_5(%arg0: i32) -> (i32, i32) {
    %c0_i32 = arith.constant 0 : i32
    %c0_i32_0 = arith.constant 0 : i32
    %c0_i32_1 = arith.constant 0 : i32
    return %c0_i32, %c0_i32_0 : i32, i32
  }
  func.func @transform_6(%arg0: i32) -> (i32, i32) {
    %c0_i32 = arith.constant 0 : i32
    %c0_i32_0 = arith.constant 0 : i32
    %c0_i32_1 = arith.constant 0 : i32
    return %c0_i32, %c0_i32_0 : i32, i32
  }
  func.func @transform_7(%arg0: i32) -> (i32, i32) {
    %c0_i32 = arith.constant 0 : i32
    %c0_i32_0 = arith.constant 0 : i32
    return %arg0, %c0_i32 : i32, i32
  }
}

</mosaic_0001>

<llo_original>
// kernel: tpu_custom_call.1
$region0: #{tpu_custom_call.1}
  #allocation0 [shape = 'u32[]', space=smem, size = 0x4, offset = 0x4, fixed_abs, tag = 'smem constant byte address 0x4 - core index']
  #allocation1 [shape = 'u32[72,128]{1,0:T(1,128)}', space=vmem, size = 0x9000, scoped, tag = 'internal scratch']
  %s0 = inlined_call_operand.hbm [shape: f32[8,768], index: 0, kind: input, shape index: {}]
  %s1 = inlined_call_operand.hbm [shape: bf16[768,512], index: 1, kind: input, shape index: {}]
  %s2 = inlined_call_operand.hbm [shape: f32[1,512], index: 2, kind: input, shape index: {}]
  %s3 = inlined_call_operand.hbm [shape: bf16[512,256], index: 3, kind: input, shape index: {}]
  %s4 = inlined_call_operand.vmem [shape: f32[1,256], index: 4, kind: input, shape index: {}]
  %s5 = inlined_call_operand.hbm [shape: bf16[256,128], index: 5, kind: input, shape index: {}]
  %s6 = inlined_call_operand.vmem [shape: f32[1,128], index: 6, kind: input, shape index: {}]
  %s7 = inlined_call_operand.hbm [shape: f32[8,128], index: 7, kind: output, shape index: {}]
  %s8 = sld [smem:[#allocation0]]
  $region58: #{tpu_custom_call.1} parent=0
    _
  %s10 = ssub.s32 1, %s8
  %s11 = scalar_select 0, %s10, %s8
  $region1: #{tpu_custom_call.1} parent=0
    #allocation2 [shape = 'u8[24576]{0}', space=vmem, size = 0x6000, scoped, tag = 'input window, operand 0, single buffered']
    #allocation3 [shape = 's32[1]{0}', space=sflag, size = 0x4, scoped, tag = 'scoped memory for tpu_custom_call.1']
    #allocation4 [shape = 's32[1]{0}', space=sflag, size = 0x4, scoped, tag = 'scoped memory for tpu_custom_call.1']
    #allocation5 [shape = 'u8[786432]{0}', space=vmem, size = 0xc0000, scoped, tag = 'input window, operand 1, single buffered']
    #allocation6 [shape = 's32[1]{0}', space=sflag, size = 0x4, scoped, tag = 'scoped memory for tpu_custom_call.1']
    #allocation7 [shape = 'u8[2048]{0}', space=vmem, size = 0x800, scoped, tag = 'input window, operand 2, single buffered']
    #allocation8 [shape = 'u8[262144]{0}', space=vmem, size = 0x40000, scoped, tag = 'input window, operand 3, single buffered']
    #allocation9 [shape = 's32[1]{0}', space=sflag, size = 0x4, scoped, tag = 'scoped memory for tpu_custom_call.1']
    #allocation10 [shape = 'u8[65536]{0}', space=vmem, size = 0x10000, scoped, tag = 'input window, operand 5, single buffered']
    #allocation11 [shape = 'u8[4096]{0}', space=vmem, size = 0x1000, scoped, tag = 'output window, operand 0, single buffered']
    %12 = vsyncpa [#allocation3], 0
    %13 = vsyncpa [#allocation6], 0
    %14 = vsyncpa [#allocation9], 0
    %15 = vsyncpa [#allocation4], 0
    // Predicated region
    $region2: #{tpu_custom_call.1} parent=1 // pred_check
      _
    $region3: #{tpu_custom_call.1} parent=1 // pred_check_branch
      %17 = sbr.rel (0) target = $region5
    $region4: #{tpu_custom_call.1} parent=1 // pred_region
      %19 = vsyncadd [#allocation3], 0
      %s21 = sshll.u32 %s0, 4
      %s22 = int_to_ptr.hbm [resolvable:$true] %s21
      %s23 = sshll.u32 [#allocation2], 4
      %s24 = int_to_ptr.vmem [resolvable:$true] %s23
      %26 = dma.hbm_to_vmem [thread:$0]  %s22, 768, %s24, [#allocation3]
    $region5: #{tpu_custom_call.1} parent=1 // pred_fallthru
      _
    // Predicated region
    $region6: #{tpu_custom_call.1} parent=1 // pred_check
      _
    $region7: #{tpu_custom_call.1} parent=1 // pred_check_branch
      %28 = sbr.rel (0) target = $region9
    $region8: #{tpu_custom_call.1} parent=1 // pred_region
      %30 = vsyncadd [#allocation6], 0
      %s31 = sshll.u32 %s1, 4
      %s32 = int_to_ptr.hbm [resolvable:$true] %s31
      %s33 = sshll.u32 [#allocation5], 4
      %s34 = int_to_ptr.vmem [resolvable:$true] %s33
      %39 = dma.hbm_to_vmem [thread:$0]  %s32, 24576, %s34, [#allocation6], 256, 256, 16
    $region9: #{tpu_custom_call.1} parent=1 // pred_fallthru
      _
    // Predicated region
    $region10: #{tpu_custom_call.1} parent=1 // pred_check
      _
    $region11: #{tpu_custom_call.1} parent=1 // pred_check_branch
      %41 = sbr.rel (0) target = $region13
    $region12: #{tpu_custom_call.1} parent=1 // pred_region
      %43 = vsyncadd [#allocation6], 0
      %s45 = sshll.u32 %s2, 4
      %s46 = int_to_ptr.hbm [resolvable:$true] %s45
      %s47 = sshll.u32 [#allocation7], 4
      %s48 = int_to_ptr.vmem [resolvable:$true] %s47
      %50 = dma.hbm_to_vmem [thread:$0]  %s46, 64, %s48, [#allocation6]
    $region13: #{tpu_custom_call.1} parent=1 // pred_fallthru
      _
    // Predicated region
    $region14: #{tpu_custom_call.1} parent=1 // pred_check
      _
    $region15: #{tpu_custom_call.1} parent=1 // pred_check_branch
      %52 = sbr.rel (0) target = $region17
    $region16: #{tpu_custom_call.1} parent=1 // pred_region
      %54 = vsyncadd [#allocation9], 0
      %s55 = sshll.u32 %s3, 4
      %s56 = int_to_ptr.hbm [resolvable:$true] %s55
      %s57 = sshll.u32 [#allocation8], 4
      %s58 = int_to_ptr.vmem [resolvable:$true] %s57
      %63 = dma.hbm_to_vmem [thread:$0]  %s56, 8192, %s58, [#allocation9], 128, 128, 8
    $region17: #{tpu_custom_call.1} parent=1 // pred_fallthru
      _
    // Predicated region
    $region18: #{tpu_custom_call.1} parent=1 // pred_check
      _
    $region19: #{tpu_custom_call.1} parent=1 // pred_check_branch
      %65 = sbr.rel (0) target = $region21
    $region20: #{tpu_custom_call.1} parent=1 // pred_region
      _
    $region21: #{tpu_custom_call.1} parent=1 // pred_fallthru
      _
    // Predicated region
    $region22: #{tpu_custom_call.1} parent=1 // pred_check
      _
    $region23: #{tpu_custom_call.1} parent=1 // pred_check_branch
      %67 = sbr.rel (0) target = $region25
    $region24: #{tpu_custom_call.1} parent=1 // pred_region
      %69 = vsyncadd [#allocation9], 0
      %s70 = sshll.u32 %s5, 4
      %s71 = int_to_ptr.hbm [resolvable:$true] %s70
      %s72 = sshll.u32 [#allocation10], 4
      %s73 = int_to_ptr.vmem [resolvable:$true] %s72
      %78 = dma.hbm_to_vmem [thread:$0]  %s71, 2048, %s73, [#allocation9], 64, 64, 4
    $region25: #{tpu_custom_call.1} parent=1 // pred_fallthru
      _
    // Predicated region
    $region26: #{tpu_custom_call.1} parent=1 // pred_check
      _
    $region27: #{tpu_custom_call.1} parent=1 // pred_check_branch
      %80 = sbr.rel (0) target = $region29
    $region28: #{tpu_custom_call.1} parent=1 // pred_region
      _
    $region29: #{tpu_custom_call.1} parent=1 // pred_fallthru
      _
    // Predicated region
    $region30: #{tpu_custom_call.1} parent=1 // pred_check
      _
    $region31: #{tpu_custom_call.1} parent=1 // pred_check_branch
      %82 = sbr.rel (0) target = $region33
    $region32: #{tpu_custom_call.1} parent=1 // pred_region
      %84 = dma.done [#allocation3], 768
    $region33: #{tpu_custom_call.1} parent=1 // pred_fallthru
      _
    // Predicated region
    $region34: #{tpu_custom_call.1} parent=1 // pred_check
      _
    $region35: #{tpu_custom_call.1} parent=1 // pred_check_branch
      %86 = sbr.rel (0) target = $region37
    $region36: #{tpu_custom_call.1} parent=1 // pred_region
      %88 = dma.done [#allocation6], 24576
    $region37: #{tpu_custom_call.1} parent=1 // pred_fallthru
      _
    // Predicated region
    $region38: #{tpu_custom_call.1} parent=1 // pred_check
      _
    $region39: #{tpu_custom_call.1} parent=1 // pred_check_branch
      %90 = sbr.rel (0) target = $region41
    $region40: #{tpu_custom_call.1} parent=1 // pred_region
      %92 = dma.done [#allocation6], 64
    $region41: #{tpu_custom_call.1} parent=1 // pred_fallthru
      _
    // Predicated region
    $region42: #{tpu_custom_call.1} parent=1 // pred_check
      _
    $region43: #{tpu_custom_call.1} parent=1 // pred_check_branch
      %94 = sbr.rel (0) target = $region45
    $region44: #{tpu_custom_call.1} parent=1 // pred_region
      %96 = dma.done [#allocation9], 8192
    $region45: #{tpu_custom_call.1} parent=1 // pred_fallthru
      _
    // Predicated region
    $region46: #{tpu_custom_call.1} parent=1 // pred_check
      _
    $region47: #{tpu_custom_call.1} parent=1 // pred_check_branch
      %98 = sbr.rel (0) target = $region49
    $region48: #{tpu_custom_call.1} parent=1 // pred_region
      %100 = dma.done [#allocation9], 2048
    $region49: #{tpu_custom_call.1} parent=1 // pred_fallthru
      _
    %v101 = vld [vmem:[#allocation2] sm:$0xff]
    %v102 = vld [vmem:[#allocation2 + $0x8] sm:$0xff]
    %v103 = vld [vmem:[#allocation2 + $0x10] sm:$0xff]
    %v104 = vld [vmem:[#allocation2 + $0x18] sm:$0xff]
    %v105 = vld [vmem:[#allocation2 + $0x20] sm:$0xff]
    %v106 = vld [vmem:[#allocation2 + $0x28] sm:$0xff]
    %v107 = vpack.c.bf16 %v101, %v101
    %v108 = vpack.c.bf16 %v102, %v102
    %v109 = vpack.c.bf16 %v103, %v103
    %v110 = vpack.c.bf16 %v104, %v104
    %v111 = vpack.c.bf16 %v105, %v105
    %v112 = vpack.c.bf16 %v106, %v106
    %v113 = vld [vmem:[#allocation5] sm:$0xff]
    %v114 = vld [vmem:[#allocation5 + $0x8] sm:$0xff]
    %v115 = vld [vmem:[#allocation5 + $0x10] sm:$0xff]
    %v116 = vld [vmem:[#allocation5 + $0x18] sm:$0xff]
    %v117 = vld [vmem:[#allocation5 + $0x20] sm:$0xff]
    %v118 = vld [vmem:[#allocation5 + $0x28] sm:$0xff]
    %v119 = vld [vmem:[#allocation5 + $0x30] sm:$0xff]
    %v120 = vld [vmem:[#allocation5 + $0x38] sm:$0xff]
    %v121 = vld [vmem:[#allocation5 + $0x40] sm:$0xff]
    %v122 = vld [vmem:[#allocation5 + $0x48] sm:$0xff]
    %v123 = vld [vmem:[#allocation5 + $0x50] sm:$0xff]
    %v124 = vld [vmem:[#allocation5 + $0x58] sm:$0xff]
    %v125 = vld [vmem:[#allocation5 + $0x60] sm:$0xff]
    %v126 = vld [vmem:[#allocation5 + $0x68] sm:$0xff]
    %v127 = vld [vmem:[#allocation5 + $0x70] sm:$0xff]
    %v128 = vld [vmem:[#allocation5 + $0x78] sm:$0xff]
    %v129 = vld [vmem:[#allocation5 + $0x80] sm:$0xff]
    %v130 = vld [vmem:[#allocation5 + $0x88] sm:$0xff]
    %v131 = vld [vmem:[#allocation5 + $0x90] sm:$0xff]
    %v132 = vld [vmem:[#allocation5 + $0x98] sm:$0xff]
    %v133 = vld [vmem:[#allocation5 + $0xa0] sm:$0xff]
    %v134 = vld [vmem:[#allocation5 + $0xa8] sm:$0xff]
    %v135 = vld [vmem:[#allocation5 + $0xb0] sm:$0xff]
    %v136 = vld [vmem:[#allocation5 + $0xb8] sm:$0xff]
    %v137 = vld [vmem:[#allocation5 + $0xc0] sm:$0xff]
    %v138 = vld [vmem:[#allocation5 + $0xc8] sm:$0xff]
    %v139 = vld [vmem:[#allocation5 + $0xd0] sm:$0xff]
    %v140 = vld [vmem:[#allocation5 + $0xd8] sm:$0xff]
    %v141 = vld [vmem:[#allocation5 + $0xe0] sm:$0xff]
    %v142 = vld [vmem:[#allocation5 + $0xe8] sm:$0xff]
    %v143 = vld [vmem:[#allocation5 + $0xf0] sm:$0xff]
    %v144 = vld [vmem:[#allocation5 + $0xf8] sm:$0xff]
    %v145 = vld [vmem:[#allocation5 + $0x100] sm:$0xff]
    %v146 = vld [vmem:[#allocation5 + $0x108] sm:$0xff]
    %v147 = vld [vmem:[#allocation5 + $0x110] sm:$0xff]
    %v148 = vld [vmem:[#allocation5 + $0x118] sm:$0xff]
    %v149 = vld [vmem:[#allocation5 + $0x120] sm:$0xff]
    %v150 = vld [vmem:[#allocation5 + $0x128] sm:$0xff]
    %v151 = vld [vmem:[#allocation5 + $0x130] sm:$0xff]
    %v152 = vld [vmem:[#allocation5 + $0x138] sm:$0xff]
    %v153 = vld [vmem:[#allocation5 + $0x140] sm:$0xff]
    %v154 = vld [vmem:[#allocation5 + $0x148] sm:$0xff]
    %v155 = vld [vmem:[#allocation5 + $0x150] sm:$0xff]
    %v156 = vld [vmem:[#allocation5 + $0x158] sm:$0xff]
    %v157 = vld [vmem:[#allocation5 + $0x160] sm:$0xff]
    %v158 = vld [vmem:[#allocation5 + $0x168] sm:$0xff]
    %v159 = vld [vmem:[#allocation5 + $0x170] sm:$0xff]
    %v160 = vld [vmem:[#allocation5 + $0x178] sm:$0xff]
    %v161 = vld [vmem:[#allocation5 + $0x180] sm:$0xff]
    %v162 = vld [vmem:[#allocation5 + $0x188] sm:$0xff]
    %v163 = vld [vmem:[#allocation5 + $0x190] sm:$0xff]
    %v164 = vld [vmem:[#allocation5 + $0x198] sm:$0xff]
    %v165 = vld [vmem:[#allocation5 + $0x1a0] sm:$0xff]
    %v166 = vld [vmem:[#allocation5 + $0x1a8] sm:$0xff]
    %v167 = vld [vmem:[#allocation5 + $0x1b0] sm:$0xff]
    %v168 = vld [vmem:[#allocation5 + $0x1b8] sm:$0xff]
    %v169 = vld [vmem:[#allocation5 + $0x1c0] sm:$0xff]
    %v170 = vld [vmem:[#allocation5 + $0x1c8] sm:$0xff]
    %v171 = vld [vmem:[#allocation5 + $0x1d0] sm:$0xff]
    %v172 = vld [vmem:[#allocation5 + $0x1d8] sm:$0xff]
    %v173 = vld [vmem:[#allocation5 + $0x1e0] sm:$0xff]
    %v174 = vld [vmem:[#allocation5 + $0x1e8] sm:$0xff]
    %v175 = vld [vmem:[#allocation5 + $0x1f0] sm:$0xff]
    %v176 = vld [vmem:[#allocation5 + $0x1f8] sm:$0xff]
    %v177 = vld [vmem:[#allocation5 + $0x200] sm:$0xff]
    %v178 = vld [vmem:[#allocation5 + $0x208] sm:$0xff]
    %v179 = vld [vmem:[#allocation5 + $0x210] sm:$0xff]
    %v180 = vld [vmem:[#allocation5 + $0x218] sm:$0xff]
    %v181 = vld [vmem:[#allocation5 + $0x220] sm:$0xff]
    %v182 = vld [vmem:[#allocation5 + $0x228] sm:$0xff]
    %v183 = vld [vmem:[#allocation5 + $0x230] sm:$0xff]
    %v184 = vld [vmem:[#allocation5 + $0x238] sm:$0xff]
    %v185 = vld [vmem:[#allocation5 + $0x240] sm:$0xff]
    %v186 = vld [vmem:[#allocation5 + $0x248] sm:$0xff]
    %v187 = vld [vmem:[#allocation5 + $0x250] sm:$0xff]
    %v188 = vld [vmem:[#allocation5 + $0x258] sm:$0xff]
    %v189 = vld [vmem:[#allocation5 + $0x260] sm:$0xff]
    %v190 = vld [vmem:[#allocation5 + $0x268] sm:$0xff]
    %v191 = vld [vmem:[#allocation5 + $0x270] sm:$0xff]
    %v192 = vld [vmem:[#allocation5 + $0x278] sm:$0xff]
    %v193 = vld [vmem:[#allocation5 + $0x280] sm:$0xff]
    %v194 = vld [vmem:[#allocation5 + $0x288] sm:$0xff]
    %v195 = vld [vmem:[#allocation5 + $0x290] sm:$0xff]
    %v196 = vld [vmem:[#allocation5 + $0x298] sm:$0xff]
    %v197 = vld [vmem:[#allocation5 + $0x2a0] sm:$0xff]
    %v198 = vld [vmem:[#allocation5 + $0x2a8] sm:$0xff]
    %v199 = vld [vmem:[#allocation5 + $0x2b0] sm:$0xff]
    %v200 = vld [vmem:[#allocation5 + $0x2b8] sm:$0xff]
    %v201 = vld [vmem:[#allocation5 + $0x2c0] sm:$0xff]
    %v202 = vld [vmem:[#allocation5 + $0x2c8] sm:$0xff]
    %v203 = vld [vmem:[#allocation5 + $0x2d0] sm:$0xff]
    %v204 = vld [vmem:[#allocation5 + $0x2d8] sm:$0xff]
    %v205 = vld [vmem:[#allocation5 + $0x2e0] sm:$0xff]
    %v206 = vld [vmem:[#allocation5 + $0x2e8] sm:$0xff]
    %v207 = vld [vmem:[#allocation5 + $0x2f0] sm:$0xff]
    %v208 = vld [vmem:[#allocation5 + $0x2f8] sm:$0xff]
    %v209 = vld [vmem:[#allocation5 + $0x300] sm:$0xff]
    %v210 = vld [vmem:[#allocation5 + $0x308] sm:$0xff]
    %v211 = vld [vmem:[#allocation5 + $0x310] sm:$0xff]
    %v212 = vld [vmem:[#allocation5 + $0x318] sm:$0xff]
    %v213 = vld [vmem:[#allocation5 + $0x320] sm:$0xff]
    %v214 = vld [vmem:[#allocation5 + $0x328] sm:$0xff]
    %v215 = vld [vmem:[#allocation5 + $0x330] sm:$0xff]
    %v216 = vld [vmem:[#allocation5 + $0x338] sm:$0xff]
    %v217 = vld [vmem:[#allocation5 + $0x340] sm:$0xff]
    %v218 = vld [vmem:[#allocation5 + $0x348] sm:$0xff]
    %v219 = vld [vmem:[#allocation5 + $0x350] sm:$0xff]
    %v220 = vld [vmem:[#allocation5 + $0x358] sm:$0xff]
    %v221 = vld [vmem:[#allocation5 + $0x360] sm:$0xff]
    %v222 = vld [vmem:[#allocation5 + $0x368] sm:$0xff]
    %v223 = vld [vmem:[#allocation5 + $0x370] sm:$0xff]
    %v224 = vld [vmem:[#allocation5 + $0x378] sm:$0xff]
    %v225 = vld [vmem:[#allocation5 + $0x380] sm:$0xff]
    %v226 = vld [vmem:[#allocation5 + $0x388] sm:$0xff]
    %v227 = vld [vmem:[#allocation5 + $0x390] sm:$0xff]
    %v228 = vld [vmem:[#allocation5 + $0x398] sm:$0xff]
    %v229 = vld [vmem:[#allocation5 + $0x3a0] sm:$0xff]
    %v230 = vld [vmem:[#allocation5 + $0x3a8] sm:$0xff]
    %v231 = vld [vmem:[#allocation5 + $0x3b0] sm:$0xff]
    %v232 = vld [vmem:[#allocation5 + $0x3b8] sm:$0xff]
    %v233 = vld [vmem:[#allocation5 + $0x3c0] sm:$0xff]
    %v234 = vld [vmem:[#allocation5 + $0x3c8] sm:$0xff]
    %v235 = vld [vmem:[#allocation5 + $0x3d0] sm:$0xff]
    %v236 = vld [vmem:[#allocation5 + $0x3d8] sm:$0xff]
    %v237 = vld [vmem:[#allocation5 + $0x3e0] sm:$0xff]
    %v238 = vld [vmem:[#allocation5 + $0x3e8] sm:$0xff]
    %v239 = vld [vmem:[#allocation5 + $0x3f0] sm:$0xff]
    %v240 = vld [vmem:[#allocation5 + $0x3f8] sm:$0xff]
    %v241 = vld [vmem:[#allocation5 + $0x400] sm:$0xff]
    %v242 = vld [vmem:[#allocation5 + $0x408] sm:$0xff]
    %v243 = vld [vmem:[#allocation5 + $0x410] sm:$0xff]
    %v244 = vld [vmem:[#allocation5 + $0x418] sm:$0xff]
    %v245 = vld [vmem:[#allocation5 + $0x420] sm:$0xff]
    %v246 = vld [vmem:[#allocation5 + $0x428] sm:$0xff]
    %v247 = vld [vmem:[#allocation5 + $0x430] sm:$0xff]
    %v248 = vld [vmem:[#allocation5 + $0x438] sm:$0xff]
    %v249 = vld [vmem:[#allocation5 + $0x440] sm:$0xff]
    %v250 = vld [vmem:[#allocation5 + $0x448] sm:$0xff]
    %v251 = vld [vmem:[#allocation5 + $0x450] sm:$0xff]
    %v252 = vld [vmem:[#allocation5 + $0x458] sm:$0xff]
    %v253 = vld [vmem:[#allocation5 + $0x460] sm:$0xff]
    %v254 = vld [vmem:[#allocation5 + $0x468] sm:$0xff]
    %v255 = vld [vmem:[#allocation5 + $0x470] sm:$0xff]
    %v256 = vld [vmem:[#allocation5 + $0x478] sm:$0xff]
    %v257 = vld [vmem:[#allocation5 + $0x480] sm:$0xff]
    %v258 = vld [vmem:[#allocation5 + $0x488] sm:$0xff]
    %v259 = vld [vmem:[#allocation5 + $0x490] sm:$0xff]
    %v260 = vld [vmem:[#allocation5 + $0x498] sm:$0xff]
    %v261 = vld [vmem:[#allocation5 + $0x4a0] sm:$0xff]
    %v262 = vld [vmem:[#allocation5 + $0x4a8] sm:$0xff]
    %v263 = vld [vmem:[#allocation5 + $0x4b0] sm:$0xff]
    %v264 = vld [vmem:[#allocation5 + $0x4b8] sm:$0xff]
    %v265 = vld [vmem:[#allocation5 + $0x4c0] sm:$0xff]
    %v266 = vld [vmem:[#allocation5 + $0x4c8] sm:$0xff]
    %v267 = vld [vmem:[#allocation5 + $0x4d0] sm:$0xff]
    %v268 = vld [vmem:[#allocation5 + $0x4d8] sm:$0xff]
    %v269 = vld [vmem:[#allocation5 + $0x4e0] sm:$0xff]
    %v270 = vld [vmem:[#allocation5 + $0x4e8] sm:$0xff]
    %v271 = vld [vmem:[#allocation5 + $0x4f0] sm:$0xff]
    %v272 = vld [vmem:[#allocation5 + $0x4f8] sm:$0xff]
    %v273 = vld [vmem:[#allocation5 + $0x500] sm:$0xff]
    %v274 = vld [vmem:[#allocation5 + $0x508] sm:$0xff]
    %v275 = vld [vmem:[#allocation5 + $0x510] sm:$0xff]
    %v276 = vld [vmem:[#allocation5 + $0x518] sm:$0xff]
    %v277 = vld [vmem:[#allocation5 + $0x520] sm:$0xff]
    %v278 = vld [vmem:[#allocation5 + $0x528] sm:$0xff]
    %v279 = vld [vmem:[#allocation5 + $0x530] sm:$0xff]
    %v280 = vld [vmem:[#allocation5 + $0x538] sm:$0xff]
    %v281 = vld [vmem:[#allocation5 + $0x540] sm:$0xff]
    %v282 = vld [vmem:[#allocation5 + $0x548] sm:$0xff]
    %v283 = vld [vmem:[#allocation5 + $0x550] sm:$0xff]
    %v284 = vld [vmem:[#allocation5 + $0x558] sm:$0xff]
    %v285 = vld [vmem:[#allocation5 + $0x560] sm:$0xff]
    %v286 = vld [vmem:[#allocation5 + $0x568] sm:$0xff]
    %v287 = vld [vmem:[#allocation5 + $0x570] sm:$0xff]
    %v288 = vld [vmem:[#allocation5 + $0x578] sm:$0xff]
    %v289 = vld [vmem:[#allocation5 + $0x580] sm:$0xff]
    %v290 = vld [vmem:[#allocation5 + $0x588] sm:$0xff]
    %v291 = vld [vmem:[#allocation5 + $0x590] sm:$0xff]
    %v292 = vld [vmem:[#allocation5 + $0x598] sm:$0xff]
    %v293 = vld [vmem:[#allocation5 + $0x5a0] sm:$0xff]
    %v294 = vld [vmem:[#allocation5 + $0x5a8] sm:$0xff]
    %v295 = vld [vmem:[#allocation5 + $0x5b0] sm:$0xff]
    %v296 = vld [vmem:[#allocation5 + $0x5b8] sm:$0xff]
    %v297 = vld [vmem:[#allocation5 + $0x5c0] sm:$0xff]
    %v298 = vld [vmem:[#allocation5 + $0x5c8] sm:$0xff]
    %v299 = vld [vmem:[#allocation5 + $0x5d0] sm:$0xff]
    %v300 = vld [vmem:[#allocation5 + $0x5d8] sm:$0xff]
    %v301 = vld [vmem:[#allocation5 + $0x5e0] sm:$0xff]
    %v302 = vld [vmem:[#allocation5 + $0x5e8] sm:$0xff]
    %v303 = vld [vmem:[#allocation5 + $0x5f0] sm:$0xff]
    %v304 = vld [vmem:[#allocation5 + $0x5f8] sm:$0xff]
    %v305 = vld [vmem:[#allocation7] sm:$0xf]
    %v307 = vperm.slane %v305, 0
    %v308 = vperm.slane %v305, 1
    %v309 = vperm.slane %v305, 2
    %v310 = vperm.slane %v305, 3
    %v507 = vunpack.c.l.b16 %v113
    %v508 = vunpack.c.h.b16 %v113
    %v509 = vunpack.c.l.b16 %v114
    %v510 = vunpack.c.h.b16 %v114
    %v511 = vunpack.c.l.b16 %v115
    %v512 = vunpack.c.h.b16 %v115
    %v513 = vunpack.c.l.b16 %v116
    %v514 = vunpack.c.h.b16 %v116
    %v515 = vunpack.c.l.b16 %v117
    %v516 = vunpack.c.h.b16 %v117
    %v517 = vunpack.c.l.b16 %v118
    %v518 = vunpack.c.h.b16 %v118
    %v519 = vunpack.c.l.b16 %v119
    %v520 = vunpack.c.h.b16 %v119
    %v521 = vunpack.c.l.b16 %v120
    %v522 = vunpack.c.h.b16 %v120
    %v523 = vunpack.c.l.b16 %v121
    %v524 = vunpack.c.h.b16 %v121
    %v525 = vunpack.c.l.b16 %v122
    %v526 = vunpack.c.h.b16 %v122
    %v527 = vunpack.c.l.b16 %v123
    %v528 = vunpack.c.h.b16 %v123
    %v529 = vunpack.c.l.b16 %v124
    %v530 = vunpack.c.h.b16 %v124
    %v531 = vunpack.c.l.b16 %v125
    %v532 = vunpack.c.h.b16 %v125
    %v533 = vunpack.c.l.b16 %v126
    %v534 = vunpack.c.h.b16 %v126
    %v535 = vunpack.c.l.b16 %v127
    %v536 = vunpack.c.h.b16 %v127
    %v537 = vunpack.c.l.b16 %v128
    %v538 = vunpack.c.h.b16 %v128
    %v539 = vunpack.c.l.b16 %v129
    %v540 = vunpack.c.h.b16 %v129
    %v541 = vunpack.c.l.b16 %v130
    %v542 = vunpack.c.h.b16 %v130
    %v543 = vunpack.c.l.b16 %v131
    %v544 = vunpack.c.h.b16 %v131
    %v545 = vunpack.c.l.b16 %v132
    %v546 = vunpack.c.h.b16 %v132
    %v547 = vunpack.c.l.b16 %v133
    %v548 = vunpack.c.h.b16 %v133
    %v549 = vunpack.c.l.b16 %v134
    %v550 = vunpack.c.h.b16 %v134
    %v551 = vunpack.c.l.b16 %v135
    %v552 = vunpack.c.h.b16 %v135
    %v553 = vunpack.c.l.b16 %v136
    %v554 = vunpack.c.h.b16 %v136
    %v555 = vunpack.c.l.b16 %v137
    %v556 = vunpack.c.h.b16 %v137
    %v557 = vunpack.c.l.b16 %v138
    %v558 = vunpack.c.h.b16 %v138
    %v559 = vunpack.c.l.b16 %v139
    %v560 = vunpack.c.h.b16 %v139
    %v561 = vunpack.c.l.b16 %v140
    %v562 = vunpack.c.h.b16 %v140
    %v563 = vunpack.c.l.b16 %v141
    %v564 = vunpack.c.h.b16 %v141
    %v565 = vunpack.c.l.b16 %v142
    %v566 = vunpack.c.h.b16 %v142
    %v567 = vunpack.c.l.b16 %v143
    %v568 = vunpack.c.h.b16 %v143
    %v569 = vunpack.c.l.b16 %v144
    %v570 = vunpack.c.h.b16 %v144
    %v571 = vunpack.c.l.b16 %v145
    %v572 = vunpack.c.h.b16 %v145
    %v573 = vunpack.c.l.b16 %v146
    %v574 = vunpack.c.h.b16 %v146
    %v575 = vunpack.c.l.b16 %v147
    %v576 = vunpack.c.h.b16 %v147
    %v577 = vunpack.c.l.b16 %v148
    %v578 = vunpack.c.h.b16 %v148
    %v579 = vunpack.c.l.b16 %v149
    %v580 = vunpack.c.h.b16 %v149
    %v581 = vunpack.c.l.b16 %v150
    %v582 = vunpack.c.h.b16 %v150
    %v583 = vunpack.c.l.b16 %v151
    %v584 = vunpack.c.h.b16 %v151
    %v585 = vunpack.c.l.b16 %v152
    %v586 = vunpack.c.h.b16 %v152
    %v587 = vunpack.c.l.b16 %v153
    %v588 = vunpack.c.h.b16 %v153
    %v589 = vunpack.c.l.b16 %v154
    %v590 = vunpack.c.h.b16 %v154
    %v591 = vunpack.c.l.b16 %v155
    %v592 = vunpack.c.h.b16 %v155
    %v593 = vunpack.c.l.b16 %v156
    %v594 = vunpack.c.h.b16 %v156
    %v595 = vunpack.c.l.b16 %v157
    %v596 = vunpack.c.h.b16 %v157
    %v597 = vunpack.c.l.b16 %v158
    %v598 = vunpack.c.h.b16 %v158
    %v599 = vunpack.c.l.b16 %v159
    %v600 = vunpack.c.h.b16 %v159
    %v601 = vunpack.c.l.b16 %v160
    %v602 = vunpack.c.h.b16 %v160
    %v603 = vunpack.c.l.b16 %v161
    %v604 = vunpack.c.h.b16 %v161
    %v605 = vunpack.c.l.b16 %v162
    %v606 = vunpack.c.h.b16 %v162
    %v607 = vunpack.c.l.b16 %v163
    %v608 = vunpack.c.h.b16 %v163
    %v609 = vunpack.c.l.b16 %v164
    %v610 = vunpack.c.h.b16 %v164
    %v611 = vunpack.c.l.b16 %v165
    %v612 = vunpack.c.h.b16 %v165
    %v613 = vunpack.c.l.b16 %v166
    %v614 = vunpack.c.h.b16 %v166
    %v615 = vunpack.c.l.b16 %v167
    %v616 = vunpack.c.h.b16 %v167
    %v617 = vunpack.c.l.b16 %v168
    %v618 = vunpack.c.h.b16 %v168
    %v619 = vunpack.c.l.b16 %v169
    %v620 = vunpack.c.h.b16 %v169
    %v621 = vunpack.c.l.b16 %v170
    %v622 = vunpack.c.h.b16 %v170
    %v623 = vunpack.c.l.b16 %v171
    %v624 = vunpack.c.h.b16 %v171
    %v625 = vunpack.c.l.b16 %v172
    %v626 = vunpack.c.h.b16 %v172
    %v627 = vunpack.c.l.b16 %v173
    %v628 = vunpack.c.h.b16 %v173
    %v629 = vunpack.c.l.b16 %v174
    %v630 = vunpack.c.h.b16 %v174
    %v631 = vunpack.c.l.b16 %v175
    %v632 = vunpack.c.h.b16 %v175
    %v633 = vunpack.c.l.b16 %v176
    %v634 = vunpack.c.h.b16 %v176
    %v635 = vunpack.c.l.b16 %v177
    %v636 = vunpack.c.h.b16 %v177
    %v637 = vunpack.c.l.b16 %v178
    %v638 = vunpack.c.h.b16 %v178
    %v639 = vunpack.c.l.b16 %v179
    %v640 = vunpack.c.h.b16 %v179
    %v641 = vunpack.c.l.b16 %v180
    %v642 = vunpack.c.h.b16 %v180
    %v643 = vunpack.c.l.b16 %v181
    %v644 = vunpack.c.h.b16 %v181
    %v645 = vunpack.c.l.b16 %v182
    %v646 = vunpack.c.h.b16 %v182
    %v647 = vunpack.c.l.b16 %v183
    %v648 = vunpack.c.h.b16 %v183
    %v649 = vunpack.c.l.b16 %v184
    %v650 = vunpack.c.h.b16 %v184
    %v651 = vunpack.c.l.b16 %v185
    %v652 = vunpack.c.h.b16 %v185
    %v653 = vunpack.c.l.b16 %v186
    %v654 = vunpack.c.h.b16 %v186
    %v655 = vunpack.c.l.b16 %v187
    %v656 = vunpack.c.h.b16 %v187
    %v657 = vunpack.c.l.b16 %v188
    %v658 = vunpack.c.h.b16 %v188
    %v659 = vunpack.c.l.b16 %v189
    %v660 = vunpack.c.h.b16 %v189
    %v661 = vunpack.c.l.b16 %v190
    %v662 = vunpack.c.h.b16 %v190
    %v663 = vunpack.c.l.b16 %v191
    %v664 = vunpack.c.h.b16 %v191
    %v665 = vunpack.c.l.b16 %v192
    %v666 = vunpack.c.h.b16 %v192
    %v667 = vunpack.c.l.b16 %v193
    %v668 = vunpack.c.h.b16 %v193
    %v669 = vunpack.c.l.b16 %v194
    %v670 = vunpack.c.h.b16 %v194
    %v671 = vunpack.c.l.b16 %v195
    %v672 = vunpack.c.h.b16 %v195
    %v673 = vunpack.c.l.b16 %v196
    %v674 = vunpack.c.h.b16 %v196
    %v675 = vunpack.c.l.b16 %v197
    %v676 = vunpack.c.h.b16 %v197
    %v677 = vunpack.c.l.b16 %v198
    %v678 = vunpack.c.h.b16 %v198
    %v679 = vunpack.c.l.b16 %v199
    %v680 = vunpack.c.h.b16 %v199
    %v681 = vunpack.c.l.b16 %v200
    %v682 = vunpack.c.h.b16 %v200
    %v683 = vunpack.c.l.b16 %v201
    %v684 = vunpack.c.h.b16 %v201
    %v685 = vunpack.c.l.b16 %v202
    %v686 = vunpack.c.h.b16 %v202
    %v687 = vunpack.c.l.b16 %v203
    %v688 = vunpack.c.h.b16 %v203
    %v689 = vunpack.c.l.b16 %v204
    %v690 = vunpack.c.h.b16 %v204
    %v691 = vunpack.c.l.b16 %v205
    %v692 = vunpack.c.h.b16 %v205
    %v693 = vunpack.c.l.b16 %v206
    %v694 = vunpack.c.h.b16 %v206
    %v695 = vunpack.c.l.b16 %v207
    %v696 = vunpack.c.h.b16 %v207
    %v697 = vunpack.c.l.b16 %v208
    %v698 = vunpack.c.h.b16 %v208
    %v699 = vunpack.c.l.b16 %v209
    %v700 = vunpack.c.h.b16 %v209
    %v701 = vunpack.c.l.b16 %v210
    %v702 = vunpack.c.h.b16 %v210
    %v703 = vunpack.c.l.b16 %v211
    %v704 = vunpack.c.h.b16 %v211
    %v705 = vunpack.c.l.b16 %v212
    %v706 = vunpack.c.h.b16 %v212
    %v707 = vunpack.c.l.b16 %v213
    %v708 = vunpack.c.h.b16 %v213
    %v709 = vunpack.c.l.b16 %v214
    %v710 = vunpack.c.h.b16 %v214
    %v711 = vunpack.c.l.b16 %v215
    %v712 = vunpack.c.h.b16 %v215
    %v713 = vunpack.c.l.b16 %v216
    %v714 = vunpack.c.h.b16 %v216
    %v715 = vunpack.c.l.b16 %v217
    %v716 = vunpack.c.h.b16 %v217
    %v717 = vunpack.c.l.b16 %v218
    %v718 = vunpack.c.h.b16 %v218
    %v719 = vunpack.c.l.b16 %v219
    %v720 = vunpack.c.h.b16 %v219
    %v721 = vunpack.c.l.b16 %v220
    %v722 = vunpack.c.h.b16 %v220
    %v723 = vunpack.c.l.b16 %v221
    %v724 = vunpack.c.h.b16 %v221
    %v725 = vunpack.c.l.b16 %v222
    %v726 = vunpack.c.h.b16 %v222
    %v727 = vunpack.c.l.b16 %v223
    %v728 = vunpack.c.h.b16 %v223
    %v729 = vunpack.c.l.b16 %v224
    %v730 = vunpack.c.h.b16 %v224
    %v731 = vunpack.c.l.b16 %v225
    %v732 = vunpack.c.h.b16 %v225
    %v733 = vunpack.c.l.b16 %v226
    %v734 = vunpack.c.h.b16 %v226
    %v735 = vunpack.c.l.b16 %v227
    %v736 = vunpack.c.h.b16 %v227
    %v737 = vunpack.c.l.b16 %v228
    %v738 = vunpack.c.h.b16 %v228
    %v739 = vunpack.c.l.b16 %v229
    %v740 = vunpack.c.h.b16 %v229
    %v741 = vunpack.c.l.b16 %v230
    %v742 = vunpack.c.h.b16 %v230
    %v743 = vunpack.c.l.b16 %v231
    %v744 = vunpack.c.h.b16 %v231
    %v745 = vunpack.c.l.b16 %v232
    %v746 = vunpack.c.h.b16 %v232
    %v747 = vunpack.c.l.b16 %v233
    %v748 = vunpack.c.h.b16 %v233
    %v749 = vunpack.c.l.b16 %v234
    %v750 = vunpack.c.h.b16 %v234
    %v751 = vunpack.c.l.b16 %v235
    %v752 = vunpack.c.h.b16 %v235
    %v753 = vunpack.c.l.b16 %v236
    %v754 = vunpack.c.h.b16 %v236
    %v755 = vunpack.c.l.b16 %v237
    %v756 = vunpack.c.h.b16 %v237
    %v757 = vunpack.c.l.b16 %v238
    %v758 = vunpack.c.h.b16 %v238
    %v759 = vunpack.c.l.b16 %v239
    %v760 = vunpack.c.h.b16 %v239
    %v761 = vunpack.c.l.b16 %v240
    %v762 = vunpack.c.h.b16 %v240
    %v763 = vunpack.c.l.b16 %v241
    %v764 = vunpack.c.h.b16 %v241
    %v765 = vunpack.c.l.b16 %v242
    %v766 = vunpack.c.h.b16 %v242
    %v767 = vunpack.c.l.b16 %v243
    %v768 = vunpack.c.h.b16 %v243
    %v769 = vunpack.c.l.b16 %v244
    %v770 = vunpack.c.h.b16 %v244
    %v771 = vunpack.c.l.b16 %v245
    %v772 = vunpack.c.h.b16 %v245
    %v773 = vunpack.c.l.b16 %v246
    %v774 = vunpack.c.h.b16 %v246
    %v775 = vunpack.c.l.b16 %v247
    %v776 = vunpack.c.h.b16 %v247
    %v777 = vunpack.c.l.b16 %v248
    %v778 = vunpack.c.h.b16 %v248
    %v779 = vunpack.c.l.b16 %v249
    %v780 = vunpack.c.h.b16 %v249
    %v781 = vunpack.c.l.b16 %v250
    %v782 = vunpack.c.h.b16 %v250
    %v783 = vunpack.c.l.b16 %v251
    %v784 = vunpack.c.h.b16 %v251
    %v785 = vunpack.c.l.b16 %v252
    %v786 = vunpack.c.h.b16 %v252
    %v787 = vunpack.c.l.b16 %v253
    %v788 = vunpack.c.h.b16 %v253
    %v789 = vunpack.c.l.b16 %v254
    %v790 = vunpack.c.h.b16 %v254
    %v791 = vunpack.c.l.b16 %v255
    %v792 = vunpack.c.h.b16 %v255
    %v793 = vunpack.c.l.b16 %v256
    %v794 = vunpack.c.h.b16 %v256
    %v795 = vunpack.c.l.b16 %v257
    %v796 = vunpack.c.h.b16 %v257
    %v797 = vunpack.c.l.b16 %v258
    %v798 = vunpack.c.h.b16 %v258
    %v799 = vunpack.c.l.b16 %v259
    %v800 = vunpack.c.h.b16 %v259
    %v801 = vunpack.c.l.b16 %v260
    %v802 = vunpack.c.h.b16 %v260
    %v803 = vunpack.c.l.b16 %v261
    %v804 = vunpack.c.h.b16 %v261
    %v805 = vunpack.c.l.b16 %v262
    %v806 = vunpack.c.h.b16 %v262
    %v807 = vunpack.c.l.b16 %v263
    %v808 = vunpack.c.h.b16 %v263
    %v809 = vunpack.c.l.b16 %v264
    %v810 = vunpack.c.h.b16 %v264
    %v811 = vunpack.c.l.b16 %v265
    %v812 = vunpack.c.h.b16 %v265
    %v813 = vunpack.c.l.b16 %v266
    %v814 = vunpack.c.h.b16 %v266
    %v815 = vunpack.c.l.b16 %v267
    %v816 = vunpack.c.h.b16 %v267
    %v817 = vunpack.c.l.b16 %v268
    %v818 = vunpack.c.h.b16 %v268
    %v819 = vunpack.c.l.b16 %v269
    %v820 = vunpack.c.h.b16 %v269
    %v821 = vunpack.c.l.b16 %v270
    %v822 = vunpack.c.h.b16 %v270
    %v823 = vunpack.c.l.b16 %v271
    %v824 = vunpack.c.h.b16 %v271
    %v825 = vunpack.c.l.b16 %v272
    %v826 = vunpack.c.h.b16 %v272
    %v827 = vunpack.c.l.b16 %v273
    %v828 = vunpack.c.h.b16 %v273
    %v829 = vunpack.c.l.b16 %v274
    %v830 = vunpack.c.h.b16 %v274
    %v831 = vunpack.c.l.b16 %v275
    %v832 = vunpack.c.h.b16 %v275
    %v833 = vunpack.c.l.b16 %v276
    %v834 = vunpack.c.h.b16 %v276
    %v835 = vunpack.c.l.b16 %v277
    %v836 = vunpack.c.h.b16 %v277
    %v837 = vunpack.c.l.b16 %v278
    %v838 = vunpack.c.h.b16 %v278
    %v839 = vunpack.c.l.b16 %v279
    %v840 = vunpack.c.h.b16 %v279
    %v841 = vunpack.c.l.b16 %v280
    %v842 = vunpack.c.h.b16 %v280
    %v843 = vunpack.c.l.b16 %v281
    %v844 = vunpack.c.h.b16 %v281
    %v845 = vunpack.c.l.b16 %v282
    %v846 = vunpack.c.h.b16 %v282
    %v847 = vunpack.c.l.b16 %v283
    %v848 = vunpack.c.h.b16 %v283
    %v849 = vunpack.c.l.b16 %v284
    %v850 = vunpack.c.h.b16 %v284
    %v851 = vunpack.c.l.b16 %v285
    %v852 = vunpack.c.h.b16 %v285
    %v853 = vunpack.c.l.b16 %v286
    %v854 = vunpack.c.h.b16 %v286
    %v855 = vunpack.c.l.b16 %v287
    %v856 = vunpack.c.h.b16 %v287
    %v857 = vunpack.c.l.b16 %v288
    %v858 = vunpack.c.h.b16 %v288
    %v859 = vunpack.c.l.b16 %v289
    %v860 = vunpack.c.h.b16 %v289
    %v861 = vunpack.c.l.b16 %v290
    %v862 = vunpack.c.h.b16 %v290
    %v863 = vunpack.c.l.b16 %v291
    %v864 = vunpack.c.h.b16 %v291
    %v865 = vunpack.c.l.b16 %v292
    %v866 = vunpack.c.h.b16 %v292
    %v867 = vunpack.c.l.b16 %v293
    %v868 = vunpack.c.h.b16 %v293
    %v869 = vunpack.c.l.b16 %v294
    %v870 = vunpack.c.h.b16 %v294
    %v871 = vunpack.c.l.b16 %v295
    %v872 = vunpack.c.h.b16 %v295
    %v873 = vunpack.c.l.b16 %v296
    %v874 = vunpack.c.h.b16 %v296
    %v875 = vunpack.c.l.b16 %v297
    %v876 = vunpack.c.h.b16 %v297
    %v877 = vunpack.c.l.b16 %v298
    %v878 = vunpack.c.h.b16 %v298
    %v879 = vunpack.c.l.b16 %v299
    %v880 = vunpack.c.h.b16 %v299
    %v881 = vunpack.c.l.b16 %v300
    %v882 = vunpack.c.h.b16 %v300
    %v883 = vunpack.c.l.b16 %v301
    %v884 = vunpack.c.h.b16 %v301
    %v885 = vunpack.c.l.b16 %v302
    %v886 = vunpack.c.h.b16 %v302
    %v887 = vunpack.c.l.b16 %v303
    %v888 = vunpack.c.h.b16 %v303
    %v889 = vunpack.c.l.b16 %v304
    %v890 = vunpack.c.h.b16 %v304
    %v891 = vpack.c.b16 %v511, %v507
    %v892 = vpack.c.b16 %v512, %v508
    %v893 = vpack.c.b16 %v513, %v509
    %v894 = vpack.c.b16 %v514, %v510
    %v895 = vpack.c.b16 %v519, %v515
    %v896 = vpack.c.b16 %v520, %v516
    %v897 = vpack.c.b16 %v521, %v517
    %v898 = vpack.c.b16 %v522, %v518
    %v899 = vpack.c.b16 %v527, %v523
    %v900 = vpack.c.b16 %v528, %v524
    %v901 = vpack.c.b16 %v529, %v525
    %v902 = vpack.c.b16 %v530, %v526
    %v903 = vpack.c.b16 %v535, %v531
    %v904 = vpack.c.b16 %v536, %v532
    %v905 = vpack.c.b16 %v537, %v533
    %v906 = vpack.c.b16 %v538, %v534
    %v907 = vpack.c.b16 %v543, %v539
    %v908 = vpack.c.b16 %v544, %v540
    %v909 = vpack.c.b16 %v545, %v541
    %v910 = vpack.c.b16 %v546, %v542
    %v911 = vpack.c.b16 %v551, %v547
    %v912 = vpack.c.b16 %v552, %v548
    %v913 = vpack.c.b16 %v553, %v549
    %v914 = vpack.c.b16 %v554, %v550
    %v915 = vpack.c.b16 %v559, %v555
    %v916 = vpack.c.b16 %v560, %v556
    %v917 = vpack.c.b16 %v561, %v557
    %v918 = vpack.c.b16 %v562, %v558
    %v919 = vpack.c.b16 %v567, %v563
    %v920 = vpack.c.b16 %v568, %v564
    %v921 = vpack.c.b16 %v569, %v565
    %v922 = vpack.c.b16 %v570, %v566
    %v923 = vpack.c.b16 %v575, %v571
    %v924 = vpack.c.b16 %v576, %v572
    %v925 = vpack.c.b16 %v577, %v573
    %v926 = vpack.c.b16 %v578, %v574
    %v927 = vpack.c.b16 %v583, %v579
    %v928 = vpack.c.b16 %v584, %v580
    %v929 = vpack.c.b16 %v585, %v581
    %v930 = vpack.c.b16 %v586, %v582
    %v931 = vpack.c.b16 %v591, %v587
    %v932 = vpack.c.b16 %v592, %v588
    %v933 = vpack.c.b16 %v593, %v589
    %v934 = vpack.c.b16 %v594, %v590
    %v935 = vpack.c.b16 %v599, %v595
    %v936 = vpack.c.b16 %v600, %v596
    %v937 = vpack.c.b16 %v601, %v597
    %v938 = vpack.c.b16 %v602, %v598
    %v939 = vpack.c.b16 %v607, %v603
    %v940 = vpack.c.b16 %v608, %v604
    %v941 = vpack.c.b16 %v609, %v605
    %v942 = vpack.c.b16 %v610, %v606
    %v943 = vpack.c.b16 %v615, %v611
    %v944 = vpack.c.b16 %v616, %v612
    %v945 = vpack.c.b16 %v617, %v613
    %v946 = vpack.c.b16 %v618, %v614
    %v947 = vpack.c.b16 %v623, %v619
    %v948 = vpack.c.b16 %v624, %v620
    %v949 = vpack.c.b16 %v625, %v621
    %v950 = vpack.c.b16 %v626, %v622
    %v951 = vpack.c.b16 %v631, %v627
    %v952 = vpack.c.b16 %v632, %v628
    %v953 = vpack.c.b16 %v633, %v629
    %v954 = vpack.c.b16 %v634, %v630
    %v955 = vpack.c.b16 %v639, %v635
    %v956 = vpack.c.b16 %v640, %v636
    %v957 = vpack.c.b16 %v641, %v637
    %v958 = vpack.c.b16 %v642, %v638
    %v959 = vpack.c.b16 %v647, %v643
    %v960 = vpack.c.b16 %v648, %v644
    %v961 = vpack.c.b16 %v649, %v645
    %v962 = vpack.c.b16 %v650, %v646
    %v963 = vpack.c.b16 %v655, %v651
    %v964 = vpack.c.b16 %v656, %v652
    %v965 = vpack.c.b16 %v657, %v653
    %v966 = vpack.c.b16 %v658, %v654
    %v967 = vpack.c.b16 %v663, %v659
    %v968 = vpack.c.b16 %v664, %v660
    %v969 = vpack.c.b16 %v665, %v661
    %v970 = vpack.c.b16 %v666, %v662
    %v971 = vpack.c.b16 %v671, %v667
    %v972 = vpack.c.b16 %v672, %v668
    %v973 = vpack.c.b16 %v673, %v669
    %v974 = vpack.c.b16 %v674, %v670
    %v975 = vpack.c.b16 %v679, %v675
    %v976 = vpack.c.b16 %v680, %v676
    %v977 = vpack.c.b16 %v681, %v677
    %v978 = vpack.c.b16 %v682, %v678
    %v979 = vpack.c.b16 %v687, %v683
    %v980 = vpack.c.b16 %v688, %v684
    %v981 = vpack.c.b16 %v689, %v685
    %v982 = vpack.c.b16 %v690, %v686
    %v983 = vpack.c.b16 %v695, %v691
    %v984 = vpack.c.b16 %v696, %v692
    %v985 = vpack.c.b16 %v697, %v693
    %v986 = vpack.c.b16 %v698, %v694
    %v987 = vpack.c.b16 %v703, %v699
    %v988 = vpack.c.b16 %v704, %v700
    %v989 = vpack.c.b16 %v705, %v701
    %v990 = vpack.c.b16 %v706, %v702
    %v991 = vpack.c.b16 %v711, %v707
    %v992 = vpack.c.b16 %v712, %v708
    %v993 = vpack.c.b16 %v713, %v709
    %v994 = vpack.c.b16 %v714, %v710
    %v995 = vpack.c.b16 %v719, %v715
    %v996 = vpack.c.b16 %v720, %v716
    %v997 = vpack.c.b16 %v721, %v717
    %v998 = vpack.c.b16 %v722, %v718
    %v999 = vpack.c.b16 %v727, %v723
    %v1000 = vpack.c.b16 %v728, %v724
    %v1001 = vpack.c.b16 %v729, %v725
    %v1002 = vpack.c.b16 %v730, %v726
    %v1003 = vpack.c.b16 %v735, %v731
    %v1004 = vpack.c.b16 %v736, %v732
    %v1005 = vpack.c.b16 %v737, %v733
    %v1006 = vpack.c.b16 %v738, %v734
    %v1007 = vpack.c.b16 %v743, %v739
    %v1008 = vpack.c.b16 %v744, %v740
    %v1009 = vpack.c.b16 %v745, %v741
    %v1010 = vpack.c.b16 %v746, %v742
    %v1011 = vpack.c.b16 %v751, %v747
    %v1012 = vpack.c.b16 %v752, %v748
    %v1013 = vpack.c.b16 %v753, %v749
    %v1014 = vpack.c.b16 %v754, %v750
    %v1015 = vpack.c.b16 %v759, %v755
    %v1016 = vpack.c.b16 %v760, %v756
    %v1017 = vpack.c.b16 %v761, %v757
    %v1018 = vpack.c.b16 %v762, %v758
    %v1019 = vpack.c.b16 %v767, %v763
    %v1020 = vpack.c.b16 %v768, %v764
    %v1021 = vpack.c.b16 %v769, %v765
    %v1022 = vpack.c.b16 %v770, %v766
    %v1023 = vpack.c.b16 %v775, %v771
    %v1024 = vpack.c.b16 %v776, %v772
    %v1025 = vpack.c.b16 %v777, %v773
    %v1026 = vpack.c.b16 %v778, %v774
    %v1027 = vpack.c.b16 %v783, %v779
    %v1028 = vpack.c.b16 %v784, %v780
    %v1029 = vpack.c.b16 %v785, %v781
    %v1030 = vpack.c.b16 %v786, %v782
    %v1031 = vpack.c.b16 %v791, %v787
    %v1032 = vpack.c.b16 %v792, %v788
    %v1033 = vpack.c.b16 %v793, %v789
    %v1034 = vpack.c.b16 %v794, %v790
    %v1035 = vpack.c.b16 %v799, %v795
    %v1036 = vpack.c.b16 %v800, %v796
    %v1037 = vpack.c.b16 %v801, %v797
    %v1038 = vpack.c.b16 %v802, %v798
    %v1039 = vpack.c.b16 %v807, %v803
    %v1040 = vpack.c.b16 %v808, %v804
    %v1041 = vpack.c.b16 %v809, %v805
    %v1042 = vpack.c.b16 %v810, %v806
    %v1043 = vpack.c.b16 %v815, %v811
    %v1044 = vpack.c.b16 %v816, %v812
    %v1045 = vpack.c.b16 %v817, %v813
    %v1046 = vpack.c.b16 %v818, %v814
    %v1047 = vpack.c.b16 %v823, %v819
    %v1048 = vpack.c.b16 %v824, %v820
    %v1049 = vpack.c.b16 %v825, %v821
    %v1050 = vpack.c.b16 %v826, %v822
    %v1051 = vpack.c.b16 %v831, %v827
    %v1052 = vpack.c.b16 %v832, %v828
    %v1053 = vpack.c.b16 %v833, %v829
    %v1054 = vpack.c.b16 %v834, %v830
    %v1055 = vpack.c.b16 %v839, %v835
    %v1056 = vpack.c.b16 %v840, %v836
    %v1057 = vpack.c.b16 %v841, %v837
    %v1058 = vpack.c.b16 %v842, %v838
    %v1059 = vpack.c.b16 %v847, %v843
    %v1060 = vpack.c.b16 %v848, %v844
    %v1061 = vpack.c.b16 %v849, %v845
    %v1062 = vpack.c.b16 %v850, %v846
    %v1063 = vpack.c.b16 %v855, %v851
    %v1064 = vpack.c.b16 %v856, %v852
    %v1065 = vpack.c.b16 %v857, %v853
    %v1066 = vpack.c.b16 %v858, %v854
    %v1067 = vpack.c.b16 %v863, %v859
    %v1068 = vpack.c.b16 %v864, %v860
    %v1069 = vpack.c.b16 %v865, %v861
    %v1070 = vpack.c.b16 %v866, %v862
    %v1071 = vpack.c.b16 %v871, %v867
    %v1072 = vpack.c.b16 %v872, %v868
    %v1073 = vpack.c.b16 %v873, %v869
    %v1074 = vpack.c.b16 %v874, %v870
    %v1075 = vpack.c.b16 %v879, %v875
    %v1076 = vpack.c.b16 %v880, %v876
    %v1077 = vpack.c.b16 %v881, %v877
    %v1078 = vpack.c.b16 %v882, %v878
    %v1079 = vpack.c.b16 %v887, %v883
    %v1080 = vpack.c.b16 %v888, %v884
    %v1081 = vpack.c.b16 %v889, %v885
    %v1082 = vpack.c.b16 %v890, %v886
    %1275 = vmatpush.bf16.msra.mxu0 %v919
    %1276 = vmatpush.bf16.msra.mxu0 %v915
    %1277 = vmatpush.bf16.msra.mxu0 %v911
    %1278 = vmatpush.bf16.msra.mxu0 %v907
    %1279 = vmatpush.bf16.msra.mxu0 %v903
    %1280 = vmatpush.bf16.msra.mxu0 %v899
    %1281 = vmatpush.bf16.msra.mxu0 %v895
    %1282 = vmatpush.bf16.msra.mxu0 %v891
    %1283 = vmatmul.bf16.gmra.mxu0 %v107
    %v1284 = vpop.f32.mrf.mxu0
    %v1285 = vadd.f32 %v307, %v1284
    %v1286 = vpop.f32.mrf.mxu0
    %1287 = vdwg.mxu0
    %1288 = vmatpush.bf16.msra.mxu0 %v951
    %1289 = vmatpush.bf16.msra.mxu0 %v947
    %1290 = vmatpush.bf16.msra.mxu0 %v943
    %1291 = vmatpush.bf16.msra.mxu0 %v939
    %1292 = vmatpush.bf16.msra.mxu0 %v935
    %1293 = vmatpush.bf16.msra.mxu0 %v931
    %1294 = vmatpush.bf16.msra.mxu0 %v927
    %1295 = vmatpush.bf16.msra.mxu0 %v923
    %1296 = vmatmul.bf16.gmra.mxu0 %v108
    %v1297 = vpop.f32.mrf.mxu0
    %v1298 = vadd.f32 %v1285, %v1297
    %v1299 = vpop.f32.mrf.mxu0
    %1300 = vdwg.mxu0
    %1301 = vmatpush.bf16.msra.mxu0 %v983
    %1302 = vmatpush.bf16.msra.mxu0 %v979
    %1303 = vmatpush.bf16.msra.mxu0 %v975
    %1304 = vmatpush.bf16.msra.mxu0 %v971
    %1305 = vmatpush.bf16.msra.mxu0 %v967
    %1306 = vmatpush.bf16.msra.mxu0 %v963
    %1307 = vmatpush.bf16.msra.mxu0 %v959
    %1308 = vmatpush.bf16.msra.mxu0 %v955
    %1309 = vmatmul.bf16.gmra.mxu0 %v109
    %v1310 = vpop.f32.mrf.mxu0
    %v1311 = vadd.f32 %v1298, %v1310
    %v1312 = vpop.f32.mrf.mxu0
    %1313 = vdwg.mxu0
    %1314 = vmatpush.bf16.msra.mxu0 %v1015
    %1315 = vmatpush.bf16.msra.mxu0 %v1011
    %1316 = vmatpush.bf16.msra.mxu0 %v1007
    %1317 = vmatpush.bf16.msra.mxu0 %v1003
    %1318 = vmatpush.bf16.msra.mxu0 %v999
    %1319 = vmatpush.bf16.msra.mxu0 %v995
    %1320 = vmatpush.bf16.msra.mxu0 %v991
    %1321 = vmatpush.bf16.msra.mxu0 %v987
    %1322 = vmatmul.bf16.gmra.mxu0 %v110
    %v1323 = vpop.f32.mrf.mxu0
    %v1324 = vadd.f32 %v1311, %v1323
    %v1325 = vpop.f32.mrf.mxu0
    %1326 = vdwg.mxu0
    %1327 = vmatpush.bf16.msra.mxu0 %v1047
    %1328 = vmatpush.bf16.msra.mxu0 %v1043
    %1329 = vmatpush.bf16.msra.mxu0 %v1039
    %1330 = vmatpush.bf16.msra.mxu0 %v1035
    %1331 = vmatpush.bf16.msra.mxu0 %v1031
    %1332 = vmatpush.bf16.msra.mxu0 %v1027
    %1333 = vmatpush.bf16.msra.mxu0 %v1023
    %1334 = vmatpush.bf16.msra.mxu0 %v1019
    %1335 = vmatmul.bf16.gmra.mxu0 %v111
    %v1336 = vpop.f32.mrf.mxu0
    %v1337 = vadd.f32 %v1324, %v1336
    %v1338 = vpop.f32.mrf.mxu0
    %1339 = vdwg.mxu0
    %1340 = vmatpush.bf16.msra.mxu0 %v1079
    %1341 = vmatpush.bf16.msra.mxu0 %v1075
    %1342 = vmatpush.bf16.msra.mxu0 %v1071
    %1343 = vmatpush.bf16.msra.mxu0 %v1067
    %1344 = vmatpush.bf16.msra.mxu0 %v1063
    %1345 = vmatpush.bf16.msra.mxu0 %v1059
    %1346 = vmatpush.bf16.msra.mxu0 %v1055
    %1347 = vmatpush.bf16.msra.mxu0 %v1051
    %1348 = vmatmul.bf16.gmra.mxu0 %v112
    %v1349 = vpop.f32.mrf.mxu0
    %v1350 = vadd.f32 %v1337, %v1349
    %v1351 = vpop.f32.mrf.mxu0
    %1352 = vdwg.mxu0
    %1353 = vmatpush.bf16.msra.mxu0 %v920
    %1354 = vmatpush.bf16.msra.mxu0 %v916
    %1355 = vmatpush.bf16.msra.mxu0 %v912
    %1356 = vmatpush.bf16.msra.mxu0 %v908
    %1357 = vmatpush.bf16.msra.mxu0 %v904
    %1358 = vmatpush.bf16.msra.mxu0 %v900
    %1359 = vmatpush.bf16.msra.mxu0 %v896
    %1360 = vmatpush.bf16.msra.mxu0 %v892
    %1361 = vmatmul.bf16.gmra.mxu0 %v107
    %v1362 = vpop.f32.mrf.mxu0
    %v1363 = vadd.f32 %v308, %v1362
    %v1364 = vpop.f32.mrf.mxu0
    %1365 = vdwg.mxu0
    %1366 = vmatpush.bf16.msra.mxu0 %v952
    %1367 = vmatpush.bf16.msra.mxu0 %v948
    %1368 = vmatpush.bf16.msra.mxu0 %v944
    %1369 = vmatpush.bf16.msra.mxu0 %v940
    %1370 = vmatpush.bf16.msra.mxu0 %v936
    %1371 = vmatpush.bf16.msra.mxu0 %v932
    %1372 = vmatpush.bf16.msra.mxu0 %v928
    %1373 = vmatpush.bf16.msra.mxu0 %v924
    %1374 = vmatmul.bf16.gmra.mxu0 %v108
    %v1375 = vpop.f32.mrf.mxu0
    %v1376 = vadd.f32 %v1363, %v1375
    %v1377 = vpop.f32.mrf.mxu0
    %1378 = vdwg.mxu0
    %1379 = vmatpush.bf16.msra.mxu0 %v984
    %1380 = vmatpush.bf16.msra.mxu0 %v980
    %1381 = vmatpush.bf16.msra.mxu0 %v976
    %1382 = vmatpush.bf16.msra.mxu0 %v972
    %1383 = vmatpush.bf16.msra.mxu0 %v968
    %1384 = vmatpush.bf16.msra.mxu0 %v964
    %1385 = vmatpush.bf16.msra.mxu0 %v960
    %1386 = vmatpush.bf16.msra.mxu0 %v956
    %1387 = vmatmul.bf16.gmra.mxu0 %v109
    %v1388 = vpop.f32.mrf.mxu0
    %v1389 = vadd.f32 %v1376, %v1388
    %v1390 = vpop.f32.mrf.mxu0
    %1391 = vdwg.mxu0
    %1392 = vmatpush.bf16.msra.mxu0 %v1016
    %1393 = vmatpush.bf16.msra.mxu0 %v1012
    %1394 = vmatpush.bf16.msra.mxu0 %v1008
    %1395 = vmatpush.bf16.msra.mxu0 %v1004
    %1396 = vmatpush.bf16.msra.mxu0 %v1000
    %1397 = vmatpush.bf16.msra.mxu0 %v996
    %1398 = vmatpush.bf16.msra.mxu0 %v992
    %1399 = vmatpush.bf16.msra.mxu0 %v988
    %1400 = vmatmul.bf16.gmra.mxu0 %v110
    %v1401 = vpop.f32.mrf.mxu0
    %v1402 = vadd.f32 %v1389, %v1401
    %v1403 = vpop.f32.mrf.mxu0
    %1404 = vdwg.mxu0
    %1405 = vmatpush.bf16.msra.mxu0 %v1048
    %1406 = vmatpush.bf16.msra.mxu0 %v1044
    %1407 = vmatpush.bf16.msra.mxu0 %v1040
    %1408 = vmatpush.bf16.msra.mxu0 %v1036
    %1409 = vmatpush.bf16.msra.mxu0 %v1032
    %1410 = vmatpush.bf16.msra.mxu0 %v1028
    %1411 = vmatpush.bf16.msra.mxu0 %v1024
    %1412 = vmatpush.bf16.msra.mxu0 %v1020
    %1413 = vmatmul.bf16.gmra.mxu0 %v111
    %v1414 = vpop.f32.mrf.mxu0
    %v1415 = vadd.f32 %v1402, %v1414
    %v1416 = vpop.f32.mrf.mxu0
    %1417 = vdwg.mxu0
    %1418 = vmatpush.bf16.msra.mxu0 %v1080
    %1419 = vmatpush.bf16.msra.mxu0 %v1076
    %1420 = vmatpush.bf16.msra.mxu0 %v1072
    %1421 = vmatpush.bf16.msra.mxu0 %v1068
    %1422 = vmatpush.bf16.msra.mxu0 %v1064
    %1423 = vmatpush.bf16.msra.mxu0 %v1060
    %1424 = vmatpush.bf16.msra.mxu0 %v1056
    %1425 = vmatpush.bf16.msra.mxu0 %v1052
    %1426 = vmatmul.bf16.gmra.mxu0 %v112
    %v1427 = vpop.f32.mrf.mxu0
    %v1428 = vadd.f32 %v1415, %v1427
    %v1429 = vpop.f32.mrf.mxu0
    %1430 = vdwg.mxu0
    %1431 = vmatpush.bf16.msra.mxu0 %v921
    %1432 = vmatpush.bf16.msra.mxu0 %v917
    %1433 = vmatpush.bf16.msra.mxu0 %v913
    %1434 = vmatpush.bf16.msra.mxu0 %v909
    %1435 = vmatpush.bf16.msra.mxu0 %v905
    %1436 = vmatpush.bf16.msra.mxu0 %v901
    %1437 = vmatpush.bf16.msra.mxu0 %v897
    %1438 = vmatpush.bf16.msra.mxu0 %v893
    %1439 = vmatmul.bf16.gmra.mxu0 %v107
    %v1440 = vpop.f32.mrf.mxu0
    %v1441 = vadd.f32 %v309, %v1440
    %v1442 = vpop.f32.mrf.mxu0
    %1443 = vdwg.mxu0
    %1444 = vmatpush.bf16.msra.mxu0 %v953
    %1445 = vmatpush.bf16.msra.mxu0 %v949
    %1446 = vmatpush.bf16.msra.mxu0 %v945
    %1447 = vmatpush.bf16.msra.mxu0 %v941
    %1448 = vmatpush.bf16.msra.mxu0 %v937
    %1449 = vmatpush.bf16.msra.mxu0 %v933
    %1450 = vmatpush.bf16.msra.mxu0 %v929
    %1451 = vmatpush.bf16.msra.mxu0 %v925
    %1452 = vmatmul.bf16.gmra.mxu0 %v108
    %v1453 = vpop.f32.mrf.mxu0
    %v1454 = vadd.f32 %v1441, %v1453
    %v1455 = vpop.f32.mrf.mxu0
    %1456 = vdwg.mxu0
    %1457 = vmatpush.bf16.msra.mxu0 %v985
    %1458 = vmatpush.bf16.msra.mxu0 %v981
    %1459 = vmatpush.bf16.msra.mxu0 %v977
    %1460 = vmatpush.bf16.msra.mxu0 %v973
    %1461 = vmatpush.bf16.msra.mxu0 %v969
    %1462 = vmatpush.bf16.msra.mxu0 %v965
    %1463 = vmatpush.bf16.msra.mxu0 %v961
    %1464 = vmatpush.bf16.msra.mxu0 %v957
    %1465 = vmatmul.bf16.gmra.mxu0 %v109
    %v1466 = vpop.f32.mrf.mxu0
    %v1467 = vadd.f32 %v1454, %v1466
    %v1468 = vpop.f32.mrf.mxu0
    %1469 = vdwg.mxu0
    %1470 = vmatpush.bf16.msra.mxu0 %v1017
    %1471 = vmatpush.bf16.msra.mxu0 %v1013
    %1472 = vmatpush.bf16.msra.mxu0 %v1009
    %1473 = vmatpush.bf16.msra.mxu0 %v1005
    %1474 = vmatpush.bf16.msra.mxu0 %v1001
    %1475 = vmatpush.bf16.msra.mxu0 %v997
    %1476 = vmatpush.bf16.msra.mxu0 %v993
    %1477 = vmatpush.bf16.msra.mxu0 %v989
    %1478 = vmatmul.bf16.gmra.mxu0 %v110
    %v1479 = vpop.f32.mrf.mxu0
    %v1480 = vadd.f32 %v1467, %v1479
    %v1481 = vpop.f32.mrf.mxu0
    %1482 = vdwg.mxu0
    %1483 = vmatpush.bf16.msra.mxu0 %v1049
    %1484 = vmatpush.bf16.msra.mxu0 %v1045
    %1485 = vmatpush.bf16.msra.mxu0 %v1041
    %1486 = vmatpush.bf16.msra.mxu0 %v1037
    %1487 = vmatpush.bf16.msra.mxu0 %v1033
    %1488 = vmatpush.bf16.msra.mxu0 %v1029
    %1489 = vmatpush.bf16.msra.mxu0 %v1025
    %1490 = vmatpush.bf16.msra.mxu0 %v1021
    %1491 = vmatmul.bf16.gmra.mxu0 %v111
    %v1492 = vpop.f32.mrf.mxu0
    %v1493 = vadd.f32 %v1480, %v1492
    %v1494 = vpop.f32.mrf.mxu0
    %1495 = vdwg.mxu0
    %1496 = vmatpush.bf16.msra.mxu0 %v1081
    %1497 = vmatpush.bf16.msra.mxu0 %v1077
    %1498 = vmatpush.bf16.msra.mxu0 %v1073
    %1499 = vmatpush.bf16.msra.mxu0 %v1069
    %1500 = vmatpush.bf16.msra.mxu0 %v1065
    %1501 = vmatpush.bf16.msra.mxu0 %v1061
    %1502 = vmatpush.bf16.msra.mxu0 %v1057
    %1503 = vmatpush.bf16.msra.mxu0 %v1053
    %1504 = vmatmul.bf16.gmra.mxu0 %v112
    %v1505 = vpop.f32.mrf.mxu0
    %v1506 = vadd.f32 %v1493, %v1505
    %v1507 = vpop.f32.mrf.mxu0
    %1508 = vdwg.mxu0
    %1509 = vmatpush.bf16.msra.mxu0 %v922
    %1510 = vmatpush.bf16.msra.mxu0 %v918
    %1511 = vmatpush.bf16.msra.mxu0 %v914
    %1512 = vmatpush.bf16.msra.mxu0 %v910
    %1513 = vmatpush.bf16.msra.mxu0 %v906
    %1514 = vmatpush.bf16.msra.mxu0 %v902
    %1515 = vmatpush.bf16.msra.mxu0 %v898
    %1516 = vmatpush.bf16.msra.mxu0 %v894
    %1517 = vmatmul.bf16.gmra.mxu0 %v107
    %v1518 = vpop.f32.mrf.mxu0
    %v1519 = vadd.f32 %v310, %v1518
    %v1520 = vpop.f32.mrf.mxu0
    %1521 = vdwg.mxu0
    %1522 = vmatpush.bf16.msra.mxu0 %v954
    %1523 = vmatpush.bf16.msra.mxu0 %v950
    %1524 = vmatpush.bf16.msra.mxu0 %v946
    %1525 = vmatpush.bf16.msra.mxu0 %v942
    %1526 = vmatpush.bf16.msra.mxu0 %v938
    %1527 = vmatpush.bf16.msra.mxu0 %v934
    %1528 = vmatpush.bf16.msra.mxu0 %v930
    %1529 = vmatpush.bf16.msra.mxu0 %v926
    %1530 = vmatmul.bf16.gmra.mxu0 %v108
    %v1531 = vpop.f32.mrf.mxu0
    %v1532 = vadd.f32 %v1519, %v1531
    %v1533 = vpop.f32.mrf.mxu0
    %1534 = vdwg.mxu0
    %1535 = vmatpush.bf16.msra.mxu0 %v986
    %1536 = vmatpush.bf16.msra.mxu0 %v982
    %1537 = vmatpush.bf16.msra.mxu0 %v978
    %1538 = vmatpush.bf16.msra.mxu0 %v974
    %1539 = vmatpush.bf16.msra.mxu0 %v970
    %1540 = vmatpush.bf16.msra.mxu0 %v966
    %1541 = vmatpush.bf16.msra.mxu0 %v962
    %1542 = vmatpush.bf16.msra.mxu0 %v958
    %1543 = vmatmul.bf16.gmra.mxu0 %v109
    %v1544 = vpop.f32.mrf.mxu0
    %v1545 = vadd.f32 %v1532, %v1544
    %v1546 = vpop.f32.mrf.mxu0
    %1547 = vdwg.mxu0
    %1548 = vmatpush.bf16.msra.mxu0 %v1018
    %1549 = vmatpush.bf16.msra.mxu0 %v1014
    %1550 = vmatpush.bf16.msra.mxu0 %v1010
    %1551 = vmatpush.bf16.msra.mxu0 %v1006
    %1552 = vmatpush.bf16.msra.mxu0 %v1002
    %1553 = vmatpush.bf16.msra.mxu0 %v998
    %1554 = vmatpush.bf16.msra.mxu0 %v994
    %1555 = vmatpush.bf16.msra.mxu0 %v990
    %1556 = vmatmul.bf16.gmra.mxu0 %v110
    %v1557 = vpop.f32.mrf.mxu0
    %v1558 = vadd.f32 %v1545, %v1557
    %v1559 = vpop.f32.mrf.mxu0
    %1560 = vdwg.mxu0
    %1561 = vmatpush.bf16.msra.mxu0 %v1050
    %1562 = vmatpush.bf16.msra.mxu0 %v1046
    %1563 = vmatpush.bf16.msra.mxu0 %v1042
    %1564 = vmatpush.bf16.msra.mxu0 %v1038
    %1565 = vmatpush.bf16.msra.mxu0 %v1034
    %1566 = vmatpush.bf16.msra.mxu0 %v1030
    %1567 = vmatpush.bf16.msra.mxu0 %v1026
    %1568 = vmatpush.bf16.msra.mxu0 %v1022
    %1569 = vmatmul.bf16.gmra.mxu0 %v111
    %v1570 = vpop.f32.mrf.mxu0
    %v1571 = vadd.f32 %v1558, %v1570
    %v1572 = vpop.f32.mrf.mxu0
    %1573 = vdwg.mxu0
    %1574 = vmatpush.bf16.msra.mxu0 %v1082
    %1575 = vmatpush.bf16.msra.mxu0 %v1078
    %1576 = vmatpush.bf16.msra.mxu0 %v1074
    %1577 = vmatpush.bf16.msra.mxu0 %v1070
    %1578 = vmatpush.bf16.msra.mxu0 %v1066
    %1579 = vmatpush.bf16.msra.mxu0 %v1062
    %1580 = vmatpush.bf16.msra.mxu0 %v1058
    %1581 = vmatpush.bf16.msra.mxu0 %v1054
    %1582 = vmatmul.bf16.gmra.mxu0 %v112
    %v1583 = vpop.f32.mrf.mxu0
    %v1584 = vadd.f32 %v1571, %v1583
    %v1585 = vpop.f32.mrf.mxu0
    %1586 = vdwg.mxu0
    %v1587 = vmax.f32 %v1350, 0.0
    %v1588 = vmax.f32 %v1428, 0.0
    %v1589 = vmax.f32 %v1506, 0.0
    %v1590 = vmax.f32 %v1584, 0.0
    %v1591 = vpack.c.bf16 %v1587, %v1587
    %v1592 = vpack.c.bf16 %v1588, %v1588
    %v1593 = vpack.c.bf16 %v1589, %v1589
    %v1594 = vpack.c.bf16 %v1590, %v1590
    %v1595 = vld [vmem:[#allocation8] sm:$0xff]
    %v1596 = vld [vmem:[#allocation8 + $0x8] sm:$0xff]
    %v1597 = vld [vmem:[#allocation8 + $0x10] sm:$0xff]
    %v1598 = vld [vmem:[#allocation8 + $0x18] sm:$0xff]
    %v1599 = vld [vmem:[#allocation8 + $0x20] sm:$0xff]
    %v1600 = vld [vmem:[#allocation8 + $0x28] sm:$0xff]
    %v1601 = vld [vmem:[#allocation8 + $0x30] sm:$0xff]
    %v1602 = vld [vmem:[#allocation8 + $0x38] sm:$0xff]
    %v1603 = vld [vmem:[#allocation8 + $0x40] sm:$0xff]
    %v1604 = vld [vmem:[#allocation8 + $0x48] sm:$0xff]
    %v1605 = vld [vmem:[#allocation8 + $0x50] sm:$0xff]
    %v1606 = vld [vmem:[#allocation8 + $0x58] sm:$0xff]
    %v1607 = vld [vmem:[#allocation8 + $0x60] sm:$0xff]
    %v1608 = vld [vmem:[#allocation8 + $0x68] sm:$0xff]
    %v1609 = vld [vmem:[#allocation8 + $0x70] sm:$0xff]
    %v1610 = vld [vmem:[#allocation8 + $0x78] sm:$0xff]
    %v1611 = vld [vmem:[#allocation8 + $0x80] sm:$0xff]
    %v1612 = vld [vmem:[#allocation8 + $0x88] sm:$0xff]
    %v1613 = vld [vmem:[#allocation8 + $0x90] sm:$0xff]
    %v1614 = vld [vmem:[#allocation8 + $0x98] sm:$0xff]
    %v1615 = vld [vmem:[#allocation8 + $0xa0] sm:$0xff]
    %v1616 = vld [vmem:[#allocation8 + $0xa8] sm:$0xff]
    %v1617 = vld [vmem:[#allocation8 + $0xb0] sm:$0xff]
    %v1618 = vld [vmem:[#allocation8 + $0xb8] sm:$0xff]
    %v1619 = vld [vmem:[#allocation8 + $0xc0] sm:$0xff]
    %v1620 = vld [vmem:[#allocation8 + $0xc8] sm:$0xff]
    %v1621 = vld [vmem:[#allocation8 + $0xd0] sm:$0xff]
    %v1622 = vld [vmem:[#allocation8 + $0xd8] sm:$0xff]
    %v1623 = vld [vmem:[#allocation8 + $0xe0] sm:$0xff]
    %v1624 = vld [vmem:[#allocation8 + $0xe8] sm:$0xff]
    %v1625 = vld [vmem:[#allocation8 + $0xf0] sm:$0xff]
    %v1626 = vld [vmem:[#allocation8 + $0xf8] sm:$0xff]
    %v1627 = vld [vmem:[#allocation8 + $0x100] sm:$0xff]
    %v1628 = vld [vmem:[#allocation8 + $0x108] sm:$0xff]
    %v1629 = vld [vmem:[#allocation8 + $0x110] sm:$0xff]
    %v1630 = vld [vmem:[#allocation8 + $0x118] sm:$0xff]
    %v1631 = vld [vmem:[#allocation8 + $0x120] sm:$0xff]
    %v1632 = vld [vmem:[#allocation8 + $0x128] sm:$0xff]
    %v1633 = vld [vmem:[#allocation8 + $0x130] sm:$0xff]
    %v1634 = vld [vmem:[#allocation8 + $0x138] sm:$0xff]
    %v1635 = vld [vmem:[#allocation8 + $0x140] sm:$0xff]
    %v1636 = vld [vmem:[#allocation8 + $0x148] sm:$0xff]
    %v1637 = vld [vmem:[#allocation8 + $0x150] sm:$0xff]
    %v1638 = vld [vmem:[#allocation8 + $0x158] sm:$0xff]
    %v1639 = vld [vmem:[#allocation8 + $0x160] sm:$0xff]
    %v1640 = vld [vmem:[#allocation8 + $0x168] sm:$0xff]
    %v1641 = vld [vmem:[#allocation8 + $0x170] sm:$0xff]
    %v1642 = vld [vmem:[#allocation8 + $0x178] sm:$0xff]
    %v1643 = vld [vmem:[#allocation8 + $0x180] sm:$0xff]
    %v1644 = vld [vmem:[#allocation8 + $0x188] sm:$0xff]
    %v1645 = vld [vmem:[#allocation8 + $0x190] sm:$0xff]
    %v1646 = vld [vmem:[#allocation8 + $0x198] sm:$0xff]
    %v1647 = vld [vmem:[#allocation8 + $0x1a0] sm:$0xff]
    %v1648 = vld [vmem:[#allocation8 + $0x1a8] sm:$0xff]
    %v1649 = vld [vmem:[#allocation8 + $0x1b0] sm:$0xff]
    %v1650 = vld [vmem:[#allocation8 + $0x1b8] sm:$0xff]
    %v1651 = vld [vmem:[#allocation8 + $0x1c0] sm:$0xff]
    %v1652 = vld [vmem:[#allocation8 + $0x1c8] sm:$0xff]
    %v1653 = vld [vmem:[#allocation8 + $0x1d0] sm:$0xff]
    %v1654 = vld [vmem:[#allocation8 + $0x1d8] sm:$0xff]
    %v1655 = vld [vmem:[#allocation8 + $0x1e0] sm:$0xff]
    %v1656 = vld [vmem:[#allocation8 + $0x1e8] sm:$0xff]
    %v1657 = vld [vmem:[#allocation8 + $0x1f0] sm:$0xff]
    %v1658 = vld [vmem:[#allocation8 + $0x1f8] sm:$0xff]
    %v1659 = vld [vmem:[%s4] sm:$0x3]
    %v1661 = vperm.slane %v1659, 0
    %v1662 = vperm.slane %v1659, 1
    %v1729 = vunpack.c.l.b16 %v1595
    %v1730 = vunpack.c.h.b16 %v1595
    %v1731 = vunpack.c.l.b16 %v1596
    %v1732 = vunpack.c.h.b16 %v1596
    %v1733 = vunpack.c.l.b16 %v1597
    %v1734 = vunpack.c.h.b16 %v1597
    %v1735 = vunpack.c.l.b16 %v1598
    %v1736 = vunpack.c.h.b16 %v1598
    %v1737 = vunpack.c.l.b16 %v1599
    %v1738 = vunpack.c.h.b16 %v1599
    %v1739 = vunpack.c.l.b16 %v1600
    %v1740 = vunpack.c.h.b16 %v1600
    %v1741 = vunpack.c.l.b16 %v1601
    %v1742 = vunpack.c.h.b16 %v1601
    %v1743 = vunpack.c.l.b16 %v1602
    %v1744 = vunpack.c.h.b16 %v1602
    %v1745 = vunpack.c.l.b16 %v1603
    %v1746 = vunpack.c.h.b16 %v1603
    %v1747 = vunpack.c.l.b16 %v1604
    %v1748 = vunpack.c.h.b16 %v1604
    %v1749 = vunpack.c.l.b16 %v1605
    %v1750 = vunpack.c.h.b16 %v1605
    %v1751 = vunpack.c.l.b16 %v1606
    %v1752 = vunpack.c.h.b16 %v1606
    %v1753 = vunpack.c.l.b16 %v1607
    %v1754 = vunpack.c.h.b16 %v1607
    %v1755 = vunpack.c.l.b16 %v1608
    %v1756 = vunpack.c.h.b16 %v1608
    %v1757 = vunpack.c.l.b16 %v1609
    %v1758 = vunpack.c.h.b16 %v1609
    %v1759 = vunpack.c.l.b16 %v1610
    %v1760 = vunpack.c.h.b16 %v1610
    %v1761 = vunpack.c.l.b16 %v1611
    %v1762 = vunpack.c.h.b16 %v1611
    %v1763 = vunpack.c.l.b16 %v1612
    %v1764 = vunpack.c.h.b16 %v1612
    %v1765 = vunpack.c.l.b16 %v1613
    %v1766 = vunpack.c.h.b16 %v1613
    %v1767 = vunpack.c.l.b16 %v1614
    %v1768 = vunpack.c.h.b16 %v1614
    %v1769 = vunpack.c.l.b16 %v1615
    %v1770 = vunpack.c.h.b16 %v1615
    %v1771 = vunpack.c.l.b16 %v1616
    %v1772 = vunpack.c.h.b16 %v1616
    %v1773 = vunpack.c.l.b16 %v1617
    %v1774 = vunpack.c.h.b16 %v1617
    %v1775 = vunpack.c.l.b16 %v1618
    %v1776 = vunpack.c.h.b16 %v1618
    %v1777 = vunpack.c.l.b16 %v1619
    %v1778 = vunpack.c.h.b16 %v1619
    %v1779 = vunpack.c.l.b16 %v1620
    %v1780 = vunpack.c.h.b16 %v1620
    %v1781 = vunpack.c.l.b16 %v1621
    %v1782 = vunpack.c.h.b16 %v1621
    %v1783 = vunpack.c.l.b16 %v1622
    %v1784 = vunpack.c.h.b16 %v1622
    %v1785 = vunpack.c.l.b16 %v1623
    %v1786 = vunpack.c.h.b16 %v1623
    %v1787 = vunpack.c.l.b16 %v1624
    %v1788 = vunpack.c.h.b16 %v1624
    %v1789 = vunpack.c.l.b16 %v1625
    %v1790 = vunpack.c.h.b16 %v1625
    %v1791 = vunpack.c.l.b16 %v1626
    %v1792 = vunpack.c.h.b16 %v1626
    %v1793 = vunpack.c.l.b16 %v1627
    %v1794 = vunpack.c.h.b16 %v1627
    %v1795 = vunpack.c.l.b16 %v1628
    %v1796 = vunpack.c.h.b16 %v1628
    %v1797 = vunpack.c.l.b16 %v1629
    %v1798 = vunpack.c.h.b16 %v1629
    %v1799 = vunpack.c.l.b16 %v1630
    %v1800 = vunpack.c.h.b16 %v1630
    %v1801 = vunpack.c.l.b16 %v1631
    %v1802 = vunpack.c.h.b16 %v1631
    %v1803 = vunpack.c.l.b16 %v1632
    %v1804 = vunpack.c.h.b16 %v1632
    %v1805 = vunpack.c.l.b16 %v1633
    %v1806 = vunpack.c.h.b16 %v1633
    %v1807 = vunpack.c.l.b16 %v1634
    %v1808 = vunpack.c.h.b16 %v1634
    %v1809 = vunpack.c.l.b16 %v1635
    %v1810 = vunpack.c.h.b16 %v1635
    %v1811 = vunpack.c.l.b16 %v1636
    %v1812 = vunpack.c.h.b16 %v1636
    %v1813 = vunpack.c.l.b16 %v1637
    %v1814 = vunpack.c.h.b16 %v1637
    %v1815 = vunpack.c.l.b16 %v1638
    %v1816 = vunpack.c.h.b16 %v1638
    %v1817 = vunpack.c.l.b16 %v1639
    %v1818 = vunpack.c.h.b16 %v1639
    %v1819 = vunpack.c.l.b16 %v1640
    %v1820 = vunpack.c.h.b16 %v1640
    %v1821 = vunpack.c.l.b16 %v1641
    %v1822 = vunpack.c.h.b16 %v1641
    %v1823 = vunpack.c.l.b16 %v1642
    %v1824 = vunpack.c.h.b16 %v1642
    %v1825 = vunpack.c.l.b16 %v1643
    %v1826 = vunpack.c.h.b16 %v1643
    %v1827 = vunpack.c.l.b16 %v1644
    %v1828 = vunpack.c.h.b16 %v1644
    %v1829 = vunpack.c.l.b16 %v1645
    %v1830 = vunpack.c.h.b16 %v1645
    %v1831 = vunpack.c.l.b16 %v1646
    %v1832 = vunpack.c.h.b16 %v1646
    %v1833 = vunpack.c.l.b16 %v1647
    %v1834 = vunpack.c.h.b16 %v1647
    %v1835 = vunpack.c.l.b16 %v1648
    %v1836 = vunpack.c.h.b16 %v1648
    %v1837 = vunpack.c.l.b16 %v1649
    %v1838 = vunpack.c.h.b16 %v1649
    %v1839 = vunpack.c.l.b16 %v1650
    %v1840 = vunpack.c.h.b16 %v1650
    %v1841 = vunpack.c.l.b16 %v1651
    %v1842 = vunpack.c.h.b16 %v1651
    %v1843 = vunpack.c.l.b16 %v1652
    %v1844 = vunpack.c.h.b16 %v1652
    %v1845 = vunpack.c.l.b16 %v1653
    %v1846 = vunpack.c.h.b16 %v1653
    %v1847 = vunpack.c.l.b16 %v1654
    %v1848 = vunpack.c.h.b16 %v1654
    %v1849 = vunpack.c.l.b16 %v1655
    %v1850 = vunpack.c.h.b16 %v1655
    %v1851 = vunpack.c.l.b16 %v1656
    %v1852 = vunpack.c.h.b16 %v1656
    %v1853 = vunpack.c.l.b16 %v1657
    %v1854 = vunpack.c.h.b16 %v1657
    %v1855 = vunpack.c.l.b16 %v1658
    %v1856 = vunpack.c.h.b16 %v1658
    %v1857 = vpack.c.b16 %v1731, %v1729
    %v1858 = vpack.c.b16 %v1732, %v1730
    %v1859 = vpack.c.b16 %v1735, %v1733
    %v1860 = vpack.c.b16 %v1736, %v1734
    %v1861 = vpack.c.b16 %v1739, %v1737
    %v1862 = vpack.c.b16 %v1740, %v1738
    %v1863 = vpack.c.b16 %v1743, %v1741
    %v1864 = vpack.c.b16 %v1744, %v1742
    %v1865 = vpack.c.b16 %v1747, %v1745
    %v1866 = vpack.c.b16 %v1748, %v1746
    %v1867 = vpack.c.b16 %v1751, %v1749
    %v1868 = vpack.c.b16 %v1752, %v1750
    %v1869 = vpack.c.b16 %v1755, %v1753
    %v1870 = vpack.c.b16 %v1756, %v1754
    %v1871 = vpack.c.b16 %v1759, %v1757
    %v1872 = vpack.c.b16 %v1760, %v1758
    %v1873 = vpack.c.b16 %v1763, %v1761
    %v1874 = vpack.c.b16 %v1764, %v1762
    %v1875 = vpack.c.b16 %v1767, %v1765
    %v1876 = vpack.c.b16 %v1768, %v1766
    %v1877 = vpack.c.b16 %v1771, %v1769
    %v1878 = vpack.c.b16 %v1772, %v1770
    %v1879 = vpack.c.b16 %v1775, %v1773
    %v1880 = vpack.c.b16 %v1776, %v1774
    %v1881 = vpack.c.b16 %v1779, %v1777
    %v1882 = vpack.c.b16 %v1780, %v1778
    %v1883 = vpack.c.b16 %v1783, %v1781
    %v1884 = vpack.c.b16 %v1784, %v1782
    %v1885 = vpack.c.b16 %v1787, %v1785
    %v1886 = vpack.c.b16 %v1788, %v1786
    %v1887 = vpack.c.b16 %v1791, %v1789
    %v1888 = vpack.c.b16 %v1792, %v1790
    %v1889 = vpack.c.b16 %v1795, %v1793
    %v1890 = vpack.c.b16 %v1796, %v1794
    %v1891 = vpack.c.b16 %v1799, %v1797
    %v1892 = vpack.c.b16 %v1800, %v1798
    %v1893 = vpack.c.b16 %v1803, %v1801
    %v1894 = vpack.c.b16 %v1804, %v1802
    %v1895 = vpack.c.b16 %v1807, %v1805
    %v1896 = vpack.c.b16 %v1808, %v1806
    %v1897 = vpack.c.b16 %v1811, %v1809
    %v1898 = vpack.c.b16 %v1812, %v1810
    %v1899 = vpack.c.b16 %v1815, %v1813
    %v1900 = vpack.c.b16 %v1816, %v1814
    %v1901 = vpack.c.b16 %v1819, %v1817
    %v1902 = vpack.c.b16 %v1820, %v1818
    %v1903 = vpack.c.b16 %v1823, %v1821
    %v1904 = vpack.c.b16 %v1824, %v1822
    %v1905 = vpack.c.b16 %v1827, %v1825
    %v1906 = vpack.c.b16 %v1828, %v1826
    %v1907 = vpack.c.b16 %v1831, %v1829
    %v1908 = vpack.c.b16 %v1832, %v1830
    %v1909 = vpack.c.b16 %v1835, %v1833
    %v1910 = vpack.c.b16 %v1836, %v1834
    %v1911 = vpack.c.b16 %v1839, %v1837
    %v1912 = vpack.c.b16 %v1840, %v1838
    %v1913 = vpack.c.b16 %v1843, %v1841
    %v1914 = vpack.c.b16 %v1844, %v1842
    %v1915 = vpack.c.b16 %v1847, %v1845
    %v1916 = vpack.c.b16 %v1848, %v1846
    %v1917 = vpack.c.b16 %v1851, %v1849
    %v1918 = vpack.c.b16 %v1852, %v1850
    %v1919 = vpack.c.b16 %v1855, %v1853
    %v1920 = vpack.c.b16 %v1856, %v1854
    %1985 = vmatpush.bf16.msra.mxu0 %v1871
    %1986 = vmatpush.bf16.msra.mxu0 %v1869
    %1987 = vmatpush.bf16.msra.mxu0 %v1867
    %1988 = vmatpush.bf16.msra.mxu0 %v1865
    %1989 = vmatpush.bf16.msra.mxu0 %v1863
    %1990 = vmatpush.bf16.msra.mxu0 %v1861
    %1991 = vmatpush.bf16.msra.mxu0 %v1859
    %1992 = vmatpush.bf16.msra.mxu0 %v1857
    %1993 = vmatmul.bf16.gmra.mxu0 %v1591
    %v1994 = vpop.f32.mrf.mxu0
    %v1995 = vadd.f32 %v1661, %v1994
    %v1996 = vpop.f32.mrf.mxu0
    %1997 = vdwg.mxu0
    %1998 = vmatpush.bf16.msra.mxu0 %v1887
    %1999 = vmatpush.bf16.msra.mxu0 %v1885
    %2000 = vmatpush.bf16.msra.mxu0 %v1883
    %2001 = vmatpush.bf16.msra.mxu0 %v1881
    %2002 = vmatpush.bf16.msra.mxu0 %v1879
    %2003 = vmatpush.bf16.msra.mxu0 %v1877
    %2004 = vmatpush.bf16.msra.mxu0 %v1875
    %2005 = vmatpush.bf16.msra.mxu0 %v1873
    %2006 = vmatmul.bf16.gmra.mxu0 %v1592
    %v2007 = vpop.f32.mrf.mxu0
    %v2008 = vadd.f32 %v1995, %v2007
    %v2009 = vpop.f32.mrf.mxu0
    %2010 = vdwg.mxu0
    %2011 = vmatpush.bf16.msra.mxu0 %v1903
    %2012 = vmatpush.bf16.msra.mxu0 %v1901
    %2013 = vmatpush.bf16.msra.mxu0 %v1899
    %2014 = vmatpush.bf16.msra.mxu0 %v1897
    %2015 = vmatpush.bf16.msra.mxu0 %v1895
    %2016 = vmatpush.bf16.msra.mxu0 %v1893
    %2017 = vmatpush.bf16.msra.mxu0 %v1891
    %2018 = vmatpush.bf16.msra.mxu0 %v1889
    %2019 = vmatmul.bf16.gmra.mxu0 %v1593
    %v2020 = vpop.f32.mrf.mxu0
    %v2021 = vadd.f32 %v2008, %v2020
    %v2022 = vpop.f32.mrf.mxu0
    %2023 = vdwg.mxu0
    %2024 = vmatpush.bf16.msra.mxu0 %v1919
    %2025 = vmatpush.bf16.msra.mxu0 %v1917
    %2026 = vmatpush.bf16.msra.mxu0 %v1915
    %2027 = vmatpush.bf16.msra.mxu0 %v1913
    %2028 = vmatpush.bf16.msra.mxu0 %v1911
    %2029 = vmatpush.bf16.msra.mxu0 %v1909
    %2030 = vmatpush.bf16.msra.mxu0 %v1907
    %2031 = vmatpush.bf16.msra.mxu0 %v1905
    %2032 = vmatmul.bf16.gmra.mxu0 %v1594
    %v2033 = vpop.f32.mrf.mxu0
    %v2034 = vadd.f32 %v2021, %v2033
    %v2035 = vpop.f32.mrf.mxu0
    %2036 = vdwg.mxu0
    %2037 = vmatpush.bf16.msra.mxu0 %v1872
    %2038 = vmatpush.bf16.msra.mxu0 %v1870
    %2039 = vmatpush.bf16.msra.mxu0 %v1868
    %2040 = vmatpush.bf16.msra.mxu0 %v1866
    %2041 = vmatpush.bf16.msra.mxu0 %v1864
    %2042 = vmatpush.bf16.msra.mxu0 %v1862
    %2043 = vmatpush.bf16.msra.mxu0 %v1860
    %2044 = vmatpush.bf16.msra.mxu0 %v1858
    %2045 = vmatmul.bf16.gmra.mxu0 %v1591
    %v2046 = vpop.f32.mrf.mxu0
    %v2047 = vadd.f32 %v1662, %v2046
    %v2048 = vpop.f32.mrf.mxu0
    %2049 = vdwg.mxu0
    %2050 = vmatpush.bf16.msra.mxu0 %v1888
    %2051 = vmatpush.bf16.msra.mxu0 %v1886
    %2052 = vmatpush.bf16.msra.mxu0 %v1884
    %2053 = vmatpush.bf16.msra.mxu0 %v1882
    %2054 = vmatpush.bf16.msra.mxu0 %v1880
    %2055 = vmatpush.bf16.msra.mxu0 %v1878
    %2056 = vmatpush.bf16.msra.mxu0 %v1876
    %2057 = vmatpush.bf16.msra.mxu0 %v1874
    %2058 = vmatmul.bf16.gmra.mxu0 %v1592
    %v2059 = vpop.f32.mrf.mxu0
    %v2060 = vadd.f32 %v2047, %v2059
    %v2061 = vpop.f32.mrf.mxu0
    %2062 = vdwg.mxu0
    %2063 = vmatpush.bf16.msra.mxu0 %v1904
    %2064 = vmatpush.bf16.msra.mxu0 %v1902
    %2065 = vmatpush.bf16.msra.mxu0 %v1900
    %2066 = vmatpush.bf16.msra.mxu0 %v1898
    %2067 = vmatpush.bf16.msra.mxu0 %v1896
    %2068 = vmatpush.bf16.msra.mxu0 %v1894
    %2069 = vmatpush.bf16.msra.mxu0 %v1892
    %2070 = vmatpush.bf16.msra.mxu0 %v1890
    %2071 = vmatmul.bf16.gmra.mxu0 %v1593
    %v2072 = vpop.f32.mrf.mxu0
    %v2073 = vadd.f32 %v2060, %v2072
    %v2074 = vpop.f32.mrf.mxu0
    %2075 = vdwg.mxu0
    %2076 = vmatpush.bf16.msra.mxu0 %v1920
    %2077 = vmatpush.bf16.msra.mxu0 %v1918
    %2078 = vmatpush.bf16.msra.mxu0 %v1916
    %2079 = vmatpush.bf16.msra.mxu0 %v1914
    %2080 = vmatpush.bf16.msra.mxu0 %v1912
    %2081 = vmatpush.bf16.msra.mxu0 %v1910
    %2082 = vmatpush.bf16.msra.mxu0 %v1908
    %2083 = vmatpush.bf16.msra.mxu0 %v1906
    %2084 = vmatmul.bf16.gmra.mxu0 %v1594
    %v2085 = vpop.f32.mrf.mxu0
    %v2086 = vadd.f32 %v2073, %v2085
    %v2087 = vpop.f32.mrf.mxu0
    %2088 = vdwg.mxu0
    %v2089 = vmax.f32 %v2034, 0.0
    %v2090 = vmax.f32 %v2086, 0.0
    %v2091 = vpack.c.bf16 %v2089, %v2089
    %v2092 = vpack.c.bf16 %v2090, %v2090
    %v2093 = vld [vmem:[#allocation10] sm:$0xf]
    %v2094 = vld [vmem:[#allocation10 + $0x4] sm:$0xf]
    %v2095 = vld [vmem:[#allocation10 + $0x8] sm:$0xf]
    %v2096 = vld [vmem:[#allocation10 + $0xc] sm:$0xf]
    %v2097 = vld [vmem:[#allocation10 + $0x10] sm:$0xf]
    %v2098 = vld [vmem:[#allocation10 + $0x14] sm:$0xf]
    %v2099 = vld [vmem:[#allocation10 + $0x18] sm:$0xf]
    %v2100 = vld [vmem:[#allocation10 + $0x1c] sm:$0xf]
    %v2101 = vld [vmem:[#allocation10 + $0x20] sm:$0xf]
    %v2102 = vld [vmem:[#allocation10 + $0x24] sm:$0xf]
    %v2103 = vld [vmem:[#allocation10 + $0x28] sm:$0xf]
    %v2104 = vld [vmem:[#allocation10 + $0x2c] sm:$0xf]
    %v2105 = vld [vmem:[#allocation10 + $0x30] sm:$0xf]
    %v2106 = vld [vmem:[#allocation10 + $0x34] sm:$0xf]
    %v2107 = vld [vmem:[#allocation10 + $0x38] sm:$0xf]
    %v2108 = vld [vmem:[#allocation10 + $0x3c] sm:$0xf]
    %v2109 = vld [vmem:[#allocation10 + $0x40] sm:$0xf]
    %v2110 = vld [vmem:[#allocation10 + $0x44] sm:$0xf]
    %v2111 = vld [vmem:[#allocation10 + $0x48] sm:$0xf]
    %v2112 = vld [vmem:[#allocation10 + $0x4c] sm:$0xf]
    %v2113 = vld [vmem:[#allocation10 + $0x50] sm:$0xf]
    %v2114 = vld [vmem:[#allocation10 + $0x54] sm:$0xf]
    %v2115 = vld [vmem:[#allocation10 + $0x58] sm:$0xf]
    %v2116 = vld [vmem:[#allocation10 + $0x5c] sm:$0xf]
    %v2117 = vld [vmem:[#allocation10 + $0x60] sm:$0xf]
    %v2118 = vld [vmem:[#allocation10 + $0x64] sm:$0xf]
    %v2119 = vld [vmem:[#allocation10 + $0x68] sm:$0xf]
    %v2120 = vld [vmem:[#allocation10 + $0x6c] sm:$0xf]
    %v2121 = vld [vmem:[#allocation10 + $0x70] sm:$0xf]
    %v2122 = vld [vmem:[#allocation10 + $0x74] sm:$0xf]
    %v2123 = vld [vmem:[#allocation10 + $0x78] sm:$0xf]
    %v2124 = vld [vmem:[#allocation10 + $0x7c] sm:$0xf]
    %v2125 = vld [vmem:[%s6] sm:$0x1]
    %v2127 = vperm.slane %v2125, 0
    %v2161 = vunpack.c.l.b16 %v2093
    %v2162 = vunpack.c.l.b16 %v2094
    %v2163 = vunpack.c.l.b16 %v2095
    %v2164 = vunpack.c.l.b16 %v2096
    %v2165 = vunpack.c.l.b16 %v2097
    %v2166 = vunpack.c.l.b16 %v2098
    %v2167 = vunpack.c.l.b16 %v2099
    %v2168 = vunpack.c.l.b16 %v2100
    %v2169 = vunpack.c.l.b16 %v2101
    %v2170 = vunpack.c.l.b16 %v2102
    %v2171 = vunpack.c.l.b16 %v2103
    %v2172 = vunpack.c.l.b16 %v2104
    %v2173 = vunpack.c.l.b16 %v2105
    %v2174 = vunpack.c.l.b16 %v2106
    %v2175 = vunpack.c.l.b16 %v2107
    %v2176 = vunpack.c.l.b16 %v2108
    %v2177 = vunpack.c.l.b16 %v2109
    %v2178 = vunpack.c.l.b16 %v2110
    %v2179 = vunpack.c.l.b16 %v2111
    %v2180 = vunpack.c.l.b16 %v2112
    %v2181 = vunpack.c.l.b16 %v2113
    %v2182 = vunpack.c.l.b16 %v2114
    %v2183 = vunpack.c.l.b16 %v2115
    %v2184 = vunpack.c.l.b16 %v2116
    %v2185 = vunpack.c.l.b16 %v2117
    %v2186 = vunpack.c.l.b16 %v2118
    %v2187 = vunpack.c.l.b16 %v2119
    %v2188 = vunpack.c.l.b16 %v2120
    %v2189 = vunpack.c.l.b16 %v2121
    %v2190 = vunpack.c.l.b16 %v2122
    %v2191 = vunpack.c.l.b16 %v2123
    %v2192 = vunpack.c.l.b16 %v2124
    %v2193 = vpack.c.b16 %v2162, %v2161
    %v2194 = vpack.c.b16 %v2164, %v2163
    %v2195 = vpack.c.b16 %v2166, %v2165
    %v2196 = vpack.c.b16 %v2168, %v2167
    %v2197 = vpack.c.b16 %v2170, %v2169
    %v2198 = vpack.c.b16 %v2172, %v2171
    %v2199 = vpack.c.b16 %v2174, %v2173
    %v2200 = vpack.c.b16 %v2176, %v2175
    %v2201 = vpack.c.b16 %v2178, %v2177
    %v2202 = vpack.c.b16 %v2180, %v2179
    %v2203 = vpack.c.b16 %v2182, %v2181
    %v2204 = vpack.c.b16 %v2184, %v2183
    %v2205 = vpack.c.b16 %v2186, %v2185
    %v2206 = vpack.c.b16 %v2188, %v2187
    %v2207 = vpack.c.b16 %v2190, %v2189
    %v2208 = vpack.c.b16 %v2192, %v2191
    %2225 = vmatpush.bf16.msra.mxu0 %v2200
    %2226 = vmatpush.bf16.msra.mxu0 %v2199
    %2227 = vmatpush.bf16.msra.mxu0 %v2198
    %2228 = vmatpush.bf16.msra.mxu0 %v2197
    %2229 = vmatpush.bf16.msra.mxu0 %v2196
    %2230 = vmatpush.bf16.msra.mxu0 %v2195
    %2231 = vmatpush.bf16.msra.mxu0 %v2194
    %2232 = vmatpush.bf16.msra.mxu0 %v2193
    %2233 = vmatmul.bf16.gmra.mxu0 %v2091
    %v2234 = vpop.f32.mrf.mxu0
    %v2235 = vadd.f32 %v2127, %v2234
    %v2236 = vpop.f32.mrf.mxu0
    %2237 = vdwg.mxu0
    %2238 = vmatpush.bf16.msra.mxu0 %v2208
    %2239 = vmatpush.bf16.msra.mxu0 %v2207
    %2240 = vmatpush.bf16.msra.mxu0 %v2206
    %2241 = vmatpush.bf16.msra.mxu0 %v2205
    %2242 = vmatpush.bf16.msra.mxu0 %v2204
    %2243 = vmatpush.bf16.msra.mxu0 %v2203
    %2244 = vmatpush.bf16.msra.mxu0 %v2202
    %2245 = vmatpush.bf16.msra.mxu0 %v2201
    %2246 = vmatmul.bf16.gmra.mxu0 %v2092
    %v2247 = vpop.f32.mrf.mxu0
    %v2248 = vadd.f32 %v2235, %v2247
    %v2249 = vpop.f32.mrf.mxu0
    %2250 = vdwg.mxu0
    %2251 = vst [vmem:[#allocation11] sm:$0xff] %v2248
    // Predicated region
    $region50: #{tpu_custom_call.1} parent=1 // pred_check
      _
    $region51: #{tpu_custom_call.1} parent=1 // pred_check_branch
      %2253 = sbr.rel (0) target = $region53
    $region52: #{tpu_custom_call.1} parent=1 // pred_region
      %2255 = vsyncadd [#allocation4], 0
      %s2257 = sshll.u32 [#allocation11], 4
      %s2258 = int_to_ptr.vmem [resolvable:$true] %s2257
      %s2259 = sshll.u32 %s7, 4
      %s2260 = int_to_ptr.hbm [resolvable:$true] %s2259
      %2262 = dma.vmem_to_hbm [thread:$0]  %s2258, 128, %s2260, [#allocation4]
    $region53: #{tpu_custom_call.1} parent=1 // pred_fallthru
      _
    // Predicated region
    $region54: #{tpu_custom_call.1} parent=1 // pred_check
      _
    $region55: #{tpu_custom_call.1} parent=1 // pred_check_branch
      %2264 = sbr.rel (0) target = $region57
    $region56: #{tpu_custom_call.1} parent=1 // pred_region
      %2266 = dma.done [#allocation4], 128
    $region57: #{tpu_custom_call.1} parent=1 // pred_fallthru
      _
    %2267 = vsyncpa [#allocation3], 1
    %2268 = vsyncpa [#allocation6], 1
    %2269 = vsyncpa [#allocation9], 1
    %2270 = vsyncpa [#allocation4], 1

</llo_original>
